<compile_context>
chip_gen: v7x
topology: tpu7x:2x2x1
jax: 0.10.0
libtpu: 0.0.40
codegen_flags: <defaults>
</compile_context>

<pallas_src>
import jax
import jax.numpy as jnp
from jax.experimental import pallas as pl
from jax.experimental.pallas import tpu as pltpu

# ----------------------- small synthetic CLIP text config -----------------------
B = 2          # batch
SEQ = 16       # token sequence length          (77 in real CLIP)
VOCAB = 512    # vocab size                     (49408 in real CLIP)
MAX_POS = 77   # max position embeddings        (77 in real CLIP)
D = 128        # embed dim                      (768 in real CLIP-L)

M = B * SEQ    # rows after flattening batch into M


# ------------------------------- Pallas kernel ----------------------------------
def _clip_embed_kernel(ids_ref, pos_ref, tok_hbm, o_ref, gather_buf, sem):
    # ids_ref : SMEM (M,) int32          (scalar-prefetched token ids)
    # pos_ref : VMEM (S, D) f32          (position embeddings for positions 0..S-1)
    # tok_hbm : HBM  (V, D) f32          (token embedding table, never fully loaded)
    # o_ref   : VMEM (M, D) f32
    # gather_buf : VMEM (M, D) f32 scratch, sem : DMA semaphores (M,)
    m, d = gather_buf.shape
    s = pos_ref.shape[0]
    b = m // s

    # Issue all row-gather DMAs (HBM -> VMEM), one D-wide row per token id.
    # NOTE: assumes ids are in [0, V) — out-of-range ids would DMA out of bounds,
    # same contract as torch.nn.Embedding with valid indices.
    for i in range(m):
        pltpu.make_async_copy(
            tok_hbm.at[pl.ds(ids_ref[i], 1), :],
            gather_buf.at[pl.ds(i, 1), :],
            sem.at[i],
        ).start()

    # Wait for all gathered rows (the wait only needs shapes for the byte count,
    # so use a static source slice and avoid SMEM reads after waits).
    for i in range(m):
        pltpu.make_async_copy(
            tok_hbm.at[pl.ds(0, 1), :],
            gather_buf.at[pl.ds(i, 1), :],
            sem.at[i],
        ).wait()

    # In-kernel batch broadcast of the (S, D) position block (b vreg-block copies),
    # then a single lane-dense (M, D) store.
    pos_full = jnp.concatenate([pos_ref[...]] * b, axis=0)        # (M, D)
    o_ref[...] = (gather_buf[...] + pos_full).astype(o_ref.dtype)


# ------------------------------ pallas_call wrapper ------------------------------
def clip_embeddings(input_ids, token_table, pos_table):
    """token_embedding(input_ids) + position_embedding(arange(S)), like
    transformers.CLIPTextEmbeddings.forward(input_ids)."""
    b, s = input_ids.shape
    v, d = token_table.shape
    m = b * s

    ids = input_ids.reshape(m).astype(jnp.int32)
    # position_ids = arange(s): static slice of the position table (done once per
    # trace in the wrapper); batch broadcast happens inside the kernel.
    pos = pos_table[:s]                                            # (S, D)

    out = pl.pallas_call(
        _clip_embed_kernel,
        out_shape=jax.ShapeDtypeStruct((m, d), token_table.dtype),
        grid_spec=pltpu.PrefetchScalarGridSpec(
            num_scalar_prefetch=1,                                 # ids -> SMEM
            grid=(1,),
            in_specs=[
                pl.BlockSpec((s, d), lambda i, ids: (0, 0)),       # pos slice (VMEM)
                pl.BlockSpec(memory_space=pl.ANY),                 # table stays in HBM
            ],
            out_specs=pl.BlockSpec((m, d), lambda i, ids: (0, 0)),
            scratch_shapes=[
                pltpu.VMEM((m, d), token_table.dtype),             # gathered rows
                pltpu.SemaphoreType.DMA((m,)),
            ],
        ),
        compiler_params=pltpu.CompilerParams(
            dimension_semantics=("arbitrary",)),
    )(ids, pos, token_table)

    return out.reshape(b, s, d)


# ------------------------------------ main ---------------------------------------
if __name__ == "__main__":
    key = jax.random.PRNGKey(0)
    k_ids, k_tok, k_pos = jax.random.split(key, 3)

    input_ids = jax.random.randint(k_ids, (B, SEQ), 0, VOCAB, dtype=jnp.int32)
    token_table = jax.random.normal(k_tok, (VOCAB, D), jnp.float32) * 0.02
    pos_table = jax.random.normal(k_pos, (MAX_POS, D), jnp.float32) * 0.02

    fwd = jax.jit(clip_embeddings)
    out = jax.block_until_ready(fwd(input_ids, token_table, pos_table))

    # Reference: exactly what CLIPTextEmbeddings.forward(input_ids) computes.
    ref = token_table[input_ids] + pos_table[:SEQ][None, :, :]

    assert out.shape == (B, SEQ, D) and out.dtype == jnp.float32
    assert bool(jnp.allclose(out, ref, atol=1e-6, rtol=1e-6)), "mismatch vs reference"
    print("KERNEL_OK")
</pallas_src>

<mosaic_0001>
module attributes {stable_mosaic.version = 11 : i64} {
  func.func @_clip_embed_kernel(%arg0: i32, %arg1: memref<32xi32, #tpu.memory_space<smem>>, %arg2: memref<16x128xf32, #tpu.memory_space<vmem>>, %arg3: memref<512x128xf32, #tpu.memory_space<any>>, %arg4: memref<32x128xf32, #tpu.memory_space<vmem>>, %arg5: memref<32x128xf32, #tpu.memory_space<vmem>>, %arg6: memref<32x!tpu.dma_semaphore, #tpu.memory_space<semaphore_mem>>) attributes {dimension_semantics = [#tpu.dimension_semantics<arbitrary>], iteration_bounds = array<i64: 1>, scalar_prefetch = 1 : i64, scratch_operands = 2 : i64, tpu.core_type = #tpu.core_type<tc>, window_params = [{pipeline_mode = #tpu.pipeline_mode<synchronous>, transform_indices = @transform_0, window_bounds = array<i64: 16, 128>}, {}, {pipeline_mode = #tpu.pipeline_mode<synchronous>, transform_indices = @transform_2, window_bounds = array<i64: 32, 128>}]} {
    %c0 = arith.constant 0 : index
    %0 = memref.load %arg1[%c0] : memref<32xi32, #tpu.memory_space<smem>>
    %c0_i32 = arith.constant 0 : i32
    %c0_i32_0 = arith.constant 0 : i32
    %1 = tpu.memref_slice %arg3[%0, %c0_i32_0] : memref<512x128xf32, #tpu.memory_space<any>> -> memref<1x128xf32, #tpu.memory_space<any>>
    %c0_i32_1 = arith.constant 0 : i32
    %c0_i32_2 = arith.constant 0 : i32
    %2 = tpu.memref_slice %arg5[%c0_i32_1, %c0_i32_2] : memref<32x128xf32, #tpu.memory_space<vmem>> -> memref<1x128xf32, #tpu.memory_space<vmem>>
    %3 = tpu.memref_slice %arg6[%c0_i32] : memref<32x!tpu.dma_semaphore, #tpu.memory_space<semaphore_mem>> -> memref<1x!tpu.dma_semaphore, #tpu.memory_space<semaphore_mem>>
    %4 = tpu.memref_squeeze %3 : memref<1x!tpu.dma_semaphore, #tpu.memory_space<semaphore_mem>> -> memref<!tpu.dma_semaphore, #tpu.memory_space<semaphore_mem>>
    tpu.enqueue_dma source(%1 : memref<1x128xf32, #tpu.memory_space<any>>) target(%2 : memref<1x128xf32, #tpu.memory_space<vmem>>) target_semaphore(%4 : memref<!tpu.dma_semaphore, #tpu.memory_space<semaphore_mem>>)
    %c1 = arith.constant 1 : index
    %5 = memref.load %arg1[%c1] : memref<32xi32, #tpu.memory_space<smem>>
    %c1_i32 = arith.constant 1 : i32
    %c0_i32_3 = arith.constant 0 : i32
    %6 = tpu.memref_slice %arg3[%5, %c0_i32_3] : memref<512x128xf32, #tpu.memory_space<any>> -> memref<1x128xf32, #tpu.memory_space<any>>
    %c1_i32_4 = arith.constant 1 : i32
    %c0_i32_5 = arith.constant 0 : i32
    %7 = tpu.memref_slice %arg5[%c1_i32_4, %c0_i32_5] : memref<32x128xf32, #tpu.memory_space<vmem>> -> memref<1x128xf32, #tpu.memory_space<vmem>>
    %8 = tpu.memref_slice %arg6[%c1_i32] : memref<32x!tpu.dma_semaphore, #tpu.memory_space<semaphore_mem>> -> memref<1x!tpu.dma_semaphore, #tpu.memory_space<semaphore_mem>>
    %9 = tpu.memref_squeeze %8 : memref<1x!tpu.dma_semaphore, #tpu.memory_space<semaphore_mem>> -> memref<!tpu.dma_semaphore, #tpu.memory_space<semaphore_mem>>
    tpu.enqueue_dma source(%6 : memref<1x128xf32, #tpu.memory_space<any>>) target(%7 : memref<1x128xf32, #tpu.memory_space<vmem>>) target_semaphore(%9 : memref<!tpu.dma_semaphore, #tpu.memory_space<semaphore_mem>>)
    %c2 = arith.constant 2 : index
    %10 = memref.load %arg1[%c2] : memref<32xi32, #tpu.memory_space<smem>>
    %c2_i32 = arith.constant 2 : i32
    %c0_i32_6 = arith.constant 0 : i32
    %11 = tpu.memref_slice %arg3[%10, %c0_i32_6] : memref<512x128xf32, #tpu.memory_space<any>> -> memref<1x128xf32, #tpu.memory_space<any>>
    %c2_i32_7 = arith.constant 2 : i32
    %c0_i32_8 = arith.constant 0 : i32
    %12 = tpu.memref_slice %arg5[%c2_i32_7, %c0_i32_8] : memref<32x128xf32, #tpu.memory_space<vmem>> -> memref<1x128xf32, #tpu.memory_space<vmem>>
    %13 = tpu.memref_slice %arg6[%c2_i32] : memref<32x!tpu.dma_semaphore, #tpu.memory_space<semaphore_mem>> -> memref<1x!tpu.dma_semaphore, #tpu.memory_space<semaphore_mem>>
    %14 = tpu.memref_squeeze %13 : memref<1x!tpu.dma_semaphore, #tpu.memory_space<semaphore_mem>> -> memref<!tpu.dma_semaphore, #tpu.memory_space<semaphore_mem>>
    tpu.enqueue_dma source(%11 : memref<1x128xf32, #tpu.memory_space<any>>) target(%12 : memref<1x128xf32, #tpu.memory_space<vmem>>) target_semaphore(%14 : memref<!tpu.dma_semaphore, #tpu.memory_space<semaphore_mem>>)
    %c3 = arith.constant 3 : index
    %15 = memref.load %arg1[%c3] : memref<32xi32, #tpu.memory_space<smem>>
    %c3_i32 = arith.constant 3 : i32
    %c0_i32_9 = arith.constant 0 : i32
    %16 = tpu.memref_slice %arg3[%15, %c0_i32_9] : memref<512x128xf32, #tpu.memory_space<any>> -> memref<1x128xf32, #tpu.memory_space<any>>
    %c3_i32_10 = arith.constant 3 : i32
    %c0_i32_11 = arith.constant 0 : i32
    %17 = tpu.memref_slice %arg5[%c3_i32_10, %c0_i32_11] : memref<32x128xf32, #tpu.memory_space<vmem>> -> memref<1x128xf32, #tpu.memory_space<vmem>>
    %18 = tpu.memref_slice %arg6[%c3_i32] : memref<32x!tpu.dma_semaphore, #tpu.memory_space<semaphore_mem>> -> memref<1x!tpu.dma_semaphore, #tpu.memory_space<semaphore_mem>>
    %19 = tpu.memref_squeeze %18 : memref<1x!tpu.dma_semaphore, #tpu.memory_space<semaphore_mem>> -> memref<!tpu.dma_semaphore, #tpu.memory_space<semaphore_mem>>
    tpu.enqueue_dma source(%16 : memref<1x128xf32, #tpu.memory_space<any>>) target(%17 : memref<1x128xf32, #tpu.memory_space<vmem>>) target_semaphore(%19 : memref<!tpu.dma_semaphore, #tpu.memory_space<semaphore_mem>>)
    %c4 = arith.constant 4 : index
    %20 = memref.load %arg1[%c4] : memref<32xi32, #tpu.memory_space<smem>>
    %c4_i32 = arith.constant 4 : i32
    %c0_i32_12 = arith.constant 0 : i32
    %21 = tpu.memref_slice %arg3[%20, %c0_i32_12] : memref<512x128xf32, #tpu.memory_space<any>> -> memref<1x128xf32, #tpu.memory_space<any>>
    %c4_i32_13 = arith.constant 4 : i32
    %c0_i32_14 = arith.constant 0 : i32
    %22 = tpu.memref_slice %arg5[%c4_i32_13, %c0_i32_14] : memref<32x128xf32, #tpu.memory_space<vmem>> -> memref<1x128xf32, #tpu.memory_space<vmem>>
    %23 = tpu.memref_slice %arg6[%c4_i32] : memref<32x!tpu.dma_semaphore, #tpu.memory_space<semaphore_mem>> -> memref<1x!tpu.dma_semaphore, #tpu.memory_space<semaphore_mem>>
    %24 = tpu.memref_squeeze %23 : memref<1x!tpu.dma_semaphore, #tpu.memory_space<semaphore_mem>> -> memref<!tpu.dma_semaphore, #tpu.memory_space<semaphore_mem>>
    tpu.enqueue_dma source(%21 : memref<1x128xf32, #tpu.memory_space<any>>) target(%22 : memref<1x128xf32, #tpu.memory_space<vmem>>) target_semaphore(%24 : memref<!tpu.dma_semaphore, #tpu.memory_space<semaphore_mem>>)
    %c5 = arith.constant 5 : index
    %25 = memref.load %arg1[%c5] : memref<32xi32, #tpu.memory_space<smem>>
    %c5_i32 = arith.constant 5 : i32
    %c0_i32_15 = arith.constant 0 : i32
    %26 = tpu.memref_slice %arg3[%25, %c0_i32_15] : memref<512x128xf32, #tpu.memory_space<any>> -> memref<1x128xf32, #tpu.memory_space<any>>
    %c5_i32_16 = arith.constant 5 : i32
    %c0_i32_17 = arith.constant 0 : i32
    %27 = tpu.memref_slice %arg5[%c5_i32_16, %c0_i32_17] : memref<32x128xf32, #tpu.memory_space<vmem>> -> memref<1x128xf32, #tpu.memory_space<vmem>>
    %28 = tpu.memref_slice %arg6[%c5_i32] : memref<32x!tpu.dma_semaphore, #tpu.memory_space<semaphore_mem>> -> memref<1x!tpu.dma_semaphore, #tpu.memory_space<semaphore_mem>>
    %29 = tpu.memref_squeeze %28 : memref<1x!tpu.dma_semaphore, #tpu.memory_space<semaphore_mem>> -> memref<!tpu.dma_semaphore, #tpu.memory_space<semaphore_mem>>
    tpu.enqueue_dma source(%26 : memref<1x128xf32, #tpu.memory_space<any>>) target(%27 : memref<1x128xf32, #tpu.memory_space<vmem>>) target_semaphore(%29 : memref<!tpu.dma_semaphore, #tpu.memory_space<semaphore_mem>>)
    %c6 = arith.constant 6 : index
    %30 = memref.load %arg1[%c6] : memref<32xi32, #tpu.memory_space<smem>>
    %c6_i32 = arith.constant 6 : i32
    %c0_i32_18 = arith.constant 0 : i32
    %31 = tpu.memref_slice %arg3[%30, %c0_i32_18] : memref<512x128xf32, #tpu.memory_space<any>> -> memref<1x128xf32, #tpu.memory_space<any>>
    %c6_i32_19 = arith.constant 6 : i32
    %c0_i32_20 = arith.constant 0 : i32
    %32 = tpu.memref_slice %arg5[%c6_i32_19, %c0_i32_20] : memref<32x128xf32, #tpu.memory_space<vmem>> -> memref<1x128xf32, #tpu.memory_space<vmem>>
    %33 = tpu.memref_slice %arg6[%c6_i32] : memref<32x!tpu.dma_semaphore, #tpu.memory_space<semaphore_mem>> -> memref<1x!tpu.dma_semaphore, #tpu.memory_space<semaphore_mem>>
    %34 = tpu.memref_squeeze %33 : memref<1x!tpu.dma_semaphore, #tpu.memory_space<semaphore_mem>> -> memref<!tpu.dma_semaphore, #tpu.memory_space<semaphore_mem>>
    tpu.enqueue_dma source(%31 : memref<1x128xf32, #tpu.memory_space<any>>) target(%32 : memref<1x128xf32, #tpu.memory_space<vmem>>) target_semaphore(%34 : memref<!tpu.dma_semaphore, #tpu.memory_space<semaphore_mem>>)
    %c7 = arith.constant 7 : index
    %35 = memref.load %arg1[%c7] : memref<32xi32, #tpu.memory_space<smem>>
    %c7_i32 = arith.constant 7 : i32
    %c0_i32_21 = arith.constant 0 : i32
    %36 = tpu.memref_slice %arg3[%35, %c0_i32_21] : memref<512x128xf32, #tpu.memory_space<any>> -> memref<1x128xf32, #tpu.memory_space<any>>
    %c7_i32_22 = arith.constant 7 : i32
    %c0_i32_23 = arith.constant 0 : i32
    %37 = tpu.memref_slice %arg5[%c7_i32_22, %c0_i32_23] : memref<32x128xf32, #tpu.memory_space<vmem>> -> memref<1x128xf32, #tpu.memory_space<vmem>>
    %38 = tpu.memref_slice %arg6[%c7_i32] : memref<32x!tpu.dma_semaphore, #tpu.memory_space<semaphore_mem>> -> memref<1x!tpu.dma_semaphore, #tpu.memory_space<semaphore_mem>>
    %39 = tpu.memref_squeeze %38 : memref<1x!tpu.dma_semaphore, #tpu.memory_space<semaphore_mem>> -> memref<!tpu.dma_semaphore, #tpu.memory_space<semaphore_mem>>
    tpu.enqueue_dma source(%36 : memref<1x128xf32, #tpu.memory_space<any>>) target(%37 : memref<1x128xf32, #tpu.memory_space<vmem>>) target_semaphore(%39 : memref<!tpu.dma_semaphore, #tpu.memory_space<semaphore_mem>>)
    %c8 = arith.constant 8 : index
    %40 = memref.load %arg1[%c8] : memref<32xi32, #tpu.memory_space<smem>>
    %c8_i32 = arith.constant 8 : i32
    %c0_i32_24 = arith.constant 0 : i32
    %41 = tpu.memref_slice %arg3[%40, %c0_i32_24] : memref<512x128xf32, #tpu.memory_space<any>> -> memref<1x128xf32, #tpu.memory_space<any>>
    %c8_i32_25 = arith.constant 8 : i32
    %c0_i32_26 = arith.constant 0 : i32
    %42 = tpu.memref_slice %arg5[%c8_i32_25, %c0_i32_26] : memref<32x128xf32, #tpu.memory_space<vmem>> -> memref<1x128xf32, #tpu.memory_space<vmem>>
    %43 = tpu.memref_slice %arg6[%c8_i32] : memref<32x!tpu.dma_semaphore, #tpu.memory_space<semaphore_mem>> -> memref<1x!tpu.dma_semaphore, #tpu.memory_space<semaphore_mem>>
    %44 = tpu.memref_squeeze %43 : memref<1x!tpu.dma_semaphore, #tpu.memory_space<semaphore_mem>> -> memref<!tpu.dma_semaphore, #tpu.memory_space<semaphore_mem>>
    tpu.enqueue_dma source(%41 : memref<1x128xf32, #tpu.memory_space<any>>) target(%42 : memref<1x128xf32, #tpu.memory_space<vmem>>) target_semaphore(%44 : memref<!tpu.dma_semaphore, #tpu.memory_space<semaphore_mem>>)
    %c9 = arith.constant 9 : index
    %45 = memref.load %arg1[%c9] : memref<32xi32, #tpu.memory_space<smem>>
    %c9_i32 = arith.constant 9 : i32
    %c0_i32_27 = arith.constant 0 : i32
    %46 = tpu.memref_slice %arg3[%45, %c0_i32_27] : memref<512x128xf32, #tpu.memory_space<any>> -> memref<1x128xf32, #tpu.memory_space<any>>
    %c9_i32_28 = arith.constant 9 : i32
    %c0_i32_29 = arith.constant 0 : i32
    %47 = tpu.memref_slice %arg5[%c9_i32_28, %c0_i32_29] : memref<32x128xf32, #tpu.memory_space<vmem>> -> memref<1x128xf32, #tpu.memory_space<vmem>>
    %48 = tpu.memref_slice %arg6[%c9_i32] : memref<32x!tpu.dma_semaphore, #tpu.memory_space<semaphore_mem>> -> memref<1x!tpu.dma_semaphore, #tpu.memory_space<semaphore_mem>>
    %49 = tpu.memref_squeeze %48 : memref<1x!tpu.dma_semaphore, #tpu.memory_space<semaphore_mem>> -> memref<!tpu.dma_semaphore, #tpu.memory_space<semaphore_mem>>
    tpu.enqueue_dma source(%46 : memref<1x128xf32, #tpu.memory_space<any>>) target(%47 : memref<1x128xf32, #tpu.memory_space<vmem>>) target_semaphore(%49 : memref<!tpu.dma_semaphore, #tpu.memory_space<semaphore_mem>>)
    %c10 = arith.constant 10 : index
    %50 = memref.load %arg1[%c10] : memref<32xi32, #tpu.memory_space<smem>>
    %c10_i32 = arith.constant 10 : i32
    %c0_i32_30 = arith.constant 0 : i32
    %51 = tpu.memref_slice %arg3[%50, %c0_i32_30] : memref<512x128xf32, #tpu.memory_space<any>> -> memref<1x128xf32, #tpu.memory_space<any>>
    %c10_i32_31 = arith.constant 10 : i32
    %c0_i32_32 = arith.constant 0 : i32
    %52 = tpu.memref_slice %arg5[%c10_i32_31, %c0_i32_32] : memref<32x128xf32, #tpu.memory_space<vmem>> -> memref<1x128xf32, #tpu.memory_space<vmem>>
    %53 = tpu.memref_slice %arg6[%c10_i32] : memref<32x!tpu.dma_semaphore, #tpu.memory_space<semaphore_mem>> -> memref<1x!tpu.dma_semaphore, #tpu.memory_space<semaphore_mem>>
    %54 = tpu.memref_squeeze %53 : memref<1x!tpu.dma_semaphore, #tpu.memory_space<semaphore_mem>> -> memref<!tpu.dma_semaphore, #tpu.memory_space<semaphore_mem>>
    tpu.enqueue_dma source(%51 : memref<1x128xf32, #tpu.memory_space<any>>) target(%52 : memref<1x128xf32, #tpu.memory_space<vmem>>) target_semaphore(%54 : memref<!tpu.dma_semaphore, #tpu.memory_space<semaphore_mem>>)
    %c11 = arith.constant 11 : index
    %55 = memref.load %arg1[%c11] : memref<32xi32, #tpu.memory_space<smem>>
    %c11_i32 = arith.constant 11 : i32
    %c0_i32_33 = arith.constant 0 : i32
    %56 = tpu.memref_slice %arg3[%55, %c0_i32_33] : memref<512x128xf32, #tpu.memory_space<any>> -> memref<1x128xf32, #tpu.memory_space<any>>
    %c11_i32_34 = arith.constant 11 : i32
    %c0_i32_35 = arith.constant 0 : i32
    %57 = tpu.memref_slice %arg5[%c11_i32_34, %c0_i32_35] : memref<32x128xf32, #tpu.memory_space<vmem>> -> memref<1x128xf32, #tpu.memory_space<vmem>>
    %58 = tpu.memref_slice %arg6[%c11_i32] : memref<32x!tpu.dma_semaphore, #tpu.memory_space<semaphore_mem>> -> memref<1x!tpu.dma_semaphore, #tpu.memory_space<semaphore_mem>>
    %59 = tpu.memref_squeeze %58 : memref<1x!tpu.dma_semaphore, #tpu.memory_space<semaphore_mem>> -> memref<!tpu.dma_semaphore, #tpu.memory_space<semaphore_mem>>
    tpu.enqueue_dma source(%56 : memref<1x128xf32, #tpu.memory_space<any>>) target(%57 : memref<1x128xf32, #tpu.memory_space<vmem>>) target_semaphore(%59 : memref<!tpu.dma_semaphore, #tpu.memory_space<semaphore_mem>>)
    %c12 = arith.constant 12 : index
    %60 = memref.load %arg1[%c12] : memref<32xi32, #tpu.memory_space<smem>>
    %c12_i32 = arith.constant 12 : i32
    %c0_i32_36 = arith.constant 0 : i32
    %61 = tpu.memref_slice %arg3[%60, %c0_i32_36] : memref<512x128xf32, #tpu.memory_space<any>> -> memref<1x128xf32, #tpu.memory_space<any>>
    %c12_i32_37 = arith.constant 12 : i32
    %c0_i32_38 = arith.constant 0 : i32
    %62 = tpu.memref_slice %arg5[%c12_i32_37, %c0_i32_38] : memref<32x128xf32, #tpu.memory_space<vmem>> -> memref<1x128xf32, #tpu.memory_space<vmem>>
    %63 = tpu.memref_slice %arg6[%c12_i32] : memref<32x!tpu.dma_semaphore, #tpu.memory_space<semaphore_mem>> -> memref<1x!tpu.dma_semaphore, #tpu.memory_space<semaphore_mem>>
    %64 = tpu.memref_squeeze %63 : memref<1x!tpu.dma_semaphore, #tpu.memory_space<semaphore_mem>> -> memref<!tpu.dma_semaphore, #tpu.memory_space<semaphore_mem>>
    tpu.enqueue_dma source(%61 : memref<1x128xf32, #tpu.memory_space<any>>) target(%62 : memref<1x128xf32, #tpu.memory_space<vmem>>) target_semaphore(%64 : memref<!tpu.dma_semaphore, #tpu.memory_space<semaphore_mem>>)
    %c13 = arith.constant 13 : index
    %65 = memref.load %arg1[%c13] : memref<32xi32, #tpu.memory_space<smem>>
    %c13_i32 = arith.constant 13 : i32
    %c0_i32_39 = arith.constant 0 : i32
    %66 = tpu.memref_slice %arg3[%65, %c0_i32_39] : memref<512x128xf32, #tpu.memory_space<any>> -> memref<1x128xf32, #tpu.memory_space<any>>
    %c13_i32_40 = arith.constant 13 : i32
    %c0_i32_41 = arith.constant 0 : i32
    %67 = tpu.memref_slice %arg5[%c13_i32_40, %c0_i32_41] : memref<32x128xf32, #tpu.memory_space<vmem>> -> memref<1x128xf32, #tpu.memory_space<vmem>>
    %68 = tpu.memref_slice %arg6[%c13_i32] : memref<32x!tpu.dma_semaphore, #tpu.memory_space<semaphore_mem>> -> memref<1x!tpu.dma_semaphore, #tpu.memory_space<semaphore_mem>>
    %69 = tpu.memref_squeeze %68 : memref<1x!tpu.dma_semaphore, #tpu.memory_space<semaphore_mem>> -> memref<!tpu.dma_semaphore, #tpu.memory_space<semaphore_mem>>
    tpu.enqueue_dma source(%66 : memref<1x128xf32, #tpu.memory_space<any>>) target(%67 : memref<1x128xf32, #tpu.memory_space<vmem>>) target_semaphore(%69 : memref<!tpu.dma_semaphore, #tpu.memory_space<semaphore_mem>>)
    %c14 = arith.constant 14 : index
    %70 = memref.load %arg1[%c14] : memref<32xi32, #tpu.memory_space<smem>>
    %c14_i32 = arith.constant 14 : i32
    %c0_i32_42 = arith.constant 0 : i32
    %71 = tpu.memref_slice %arg3[%70, %c0_i32_42] : memref<512x128xf32, #tpu.memory_space<any>> -> memref<1x128xf32, #tpu.memory_space<any>>
    %c14_i32_43 = arith.constant 14 : i32
    %c0_i32_44 = arith.constant 0 : i32
    %72 = tpu.memref_slice %arg5[%c14_i32_43, %c0_i32_44] : memref<32x128xf32, #tpu.memory_space<vmem>> -> memref<1x128xf32, #tpu.memory_space<vmem>>
    %73 = tpu.memref_slice %arg6[%c14_i32] : memref<32x!tpu.dma_semaphore, #tpu.memory_space<semaphore_mem>> -> memref<1x!tpu.dma_semaphore, #tpu.memory_space<semaphore_mem>>
    %74 = tpu.memref_squeeze %73 : memref<1x!tpu.dma_semaphore, #tpu.memory_space<semaphore_mem>> -> memref<!tpu.dma_semaphore, #tpu.memory_space<semaphore_mem>>
    tpu.enqueue_dma source(%71 : memref<1x128xf32, #tpu.memory_space<any>>) target(%72 : memref<1x128xf32, #tpu.memory_space<vmem>>) target_semaphore(%74 : memref<!tpu.dma_semaphore, #tpu.memory_space<semaphore_mem>>)
    %c15 = arith.constant 15 : index
    %75 = memref.load %arg1[%c15] : memref<32xi32, #tpu.memory_space<smem>>
    %c15_i32 = arith.constant 15 : i32
    %c0_i32_45 = arith.constant 0 : i32
    %76 = tpu.memref_slice %arg3[%75, %c0_i32_45] : memref<512x128xf32, #tpu.memory_space<any>> -> memref<1x128xf32, #tpu.memory_space<any>>
    %c15_i32_46 = arith.constant 15 : i32
    %c0_i32_47 = arith.constant 0 : i32
    %77 = tpu.memref_slice %arg5[%c15_i32_46, %c0_i32_47] : memref<32x128xf32, #tpu.memory_space<vmem>> -> memref<1x128xf32, #tpu.memory_space<vmem>>
    %78 = tpu.memref_slice %arg6[%c15_i32] : memref<32x!tpu.dma_semaphore, #tpu.memory_space<semaphore_mem>> -> memref<1x!tpu.dma_semaphore, #tpu.memory_space<semaphore_mem>>
    %79 = tpu.memref_squeeze %78 : memref<1x!tpu.dma_semaphore, #tpu.memory_space<semaphore_mem>> -> memref<!tpu.dma_semaphore, #tpu.memory_space<semaphore_mem>>
    tpu.enqueue_dma source(%76 : memref<1x128xf32, #tpu.memory_space<any>>) target(%77 : memref<1x128xf32, #tpu.memory_space<vmem>>) target_semaphore(%79 : memref<!tpu.dma_semaphore, #tpu.memory_space<semaphore_mem>>)
    %c16 = arith.constant 16 : index
    %80 = memref.load %arg1[%c16] : memref<32xi32, #tpu.memory_space<smem>>
    %c16_i32 = arith.constant 16 : i32
    %c0_i32_48 = arith.constant 0 : i32
    %81 = tpu.memref_slice %arg3[%80, %c0_i32_48] : memref<512x128xf32, #tpu.memory_space<any>> -> memref<1x128xf32, #tpu.memory_space<any>>
    %c16_i32_49 = arith.constant 16 : i32
    %c0_i32_50 = arith.constant 0 : i32
    %82 = tpu.memref_slice %arg5[%c16_i32_49, %c0_i32_50] : memref<32x128xf32, #tpu.memory_space<vmem>> -> memref<1x128xf32, #tpu.memory_space<vmem>>
    %83 = tpu.memref_slice %arg6[%c16_i32] : memref<32x!tpu.dma_semaphore, #tpu.memory_space<semaphore_mem>> -> memref<1x!tpu.dma_semaphore, #tpu.memory_space<semaphore_mem>>
    %84 = tpu.memref_squeeze %83 : memref<1x!tpu.dma_semaphore, #tpu.memory_space<semaphore_mem>> -> memref<!tpu.dma_semaphore, #tpu.memory_space<semaphore_mem>>
    tpu.enqueue_dma source(%81 : memref<1x128xf32, #tpu.memory_space<any>>) target(%82 : memref<1x128xf32, #tpu.memory_space<vmem>>) target_semaphore(%84 : memref<!tpu.dma_semaphore, #tpu.memory_space<semaphore_mem>>)
    %c17 = arith.constant 17 : index
    %85 = memref.load %arg1[%c17] : memref<32xi32, #tpu.memory_space<smem>>
    %c17_i32 = arith.constant 17 : i32
    %c0_i32_51 = arith.constant 0 : i32
    %86 = tpu.memref_slice %arg3[%85, %c0_i32_51] : memref<512x128xf32, #tpu.memory_space<any>> -> memref<1x128xf32, #tpu.memory_space<any>>
    %c17_i32_52 = arith.constant 17 : i32
    %c0_i32_53 = arith.constant 0 : i32
    %87 = tpu.memref_slice %arg5[%c17_i32_52, %c0_i32_53] : memref<32x128xf32, #tpu.memory_space<vmem>> -> memref<1x128xf32, #tpu.memory_space<vmem>>
    %88 = tpu.memref_slice %arg6[%c17_i32] : memref<32x!tpu.dma_semaphore, #tpu.memory_space<semaphore_mem>> -> memref<1x!tpu.dma_semaphore, #tpu.memory_space<semaphore_mem>>
    %89 = tpu.memref_squeeze %88 : memref<1x!tpu.dma_semaphore, #tpu.memory_space<semaphore_mem>> -> memref<!tpu.dma_semaphore, #tpu.memory_space<semaphore_mem>>
    tpu.enqueue_dma source(%86 : memref<1x128xf32, #tpu.memory_space<any>>) target(%87 : memref<1x128xf32, #tpu.memory_space<vmem>>) target_semaphore(%89 : memref<!tpu.dma_semaphore, #tpu.memory_space<semaphore_mem>>)
    %c18 = arith.constant 18 : index
    %90 = memref.load %arg1[%c18] : memref<32xi32, #tpu.memory_space<smem>>
    %c18_i32 = arith.constant 18 : i32
    %c0_i32_54 = arith.constant 0 : i32
    %91 = tpu.memref_slice %arg3[%90, %c0_i32_54] : memref<512x128xf32, #tpu.memory_space<any>> -> memref<1x128xf32, #tpu.memory_space<any>>
    %c18_i32_55 = arith.constant 18 : i32
    %c0_i32_56 = arith.constant 0 : i32
    %92 = tpu.memref_slice %arg5[%c18_i32_55, %c0_i32_56] : memref<32x128xf32, #tpu.memory_space<vmem>> -> memref<1x128xf32, #tpu.memory_space<vmem>>
    %93 = tpu.memref_slice %arg6[%c18_i32] : memref<32x!tpu.dma_semaphore, #tpu.memory_space<semaphore_mem>> -> memref<1x!tpu.dma_semaphore, #tpu.memory_space<semaphore_mem>>
    %94 = tpu.memref_squeeze %93 : memref<1x!tpu.dma_semaphore, #tpu.memory_space<semaphore_mem>> -> memref<!tpu.dma_semaphore, #tpu.memory_space<semaphore_mem>>
    tpu.enqueue_dma source(%91 : memref<1x128xf32, #tpu.memory_space<any>>) target(%92 : memref<1x128xf32, #tpu.memory_space<vmem>>) target_semaphore(%94 : memref<!tpu.dma_semaphore, #tpu.memory_space<semaphore_mem>>)
    %c19 = arith.constant 19 : index
    %95 = memref.load %arg1[%c19] : memref<32xi32, #tpu.memory_space<smem>>
    %c19_i32 = arith.constant 19 : i32
    %c0_i32_57 = arith.constant 0 : i32
    %96 = tpu.memref_slice %arg3[%95, %c0_i32_57] : memref<512x128xf32, #tpu.memory_space<any>> -> memref<1x128xf32, #tpu.memory_space<any>>
    %c19_i32_58 = arith.constant 19 : i32
    %c0_i32_59 = arith.constant 0 : i32
    %97 = tpu.memref_slice %arg5[%c19_i32_58, %c0_i32_59] : memref<32x128xf32, #tpu.memory_space<vmem>> -> memref<1x128xf32, #tpu.memory_space<vmem>>
    %98 = tpu.memref_slice %arg6[%c19_i32] : memref<32x!tpu.dma_semaphore, #tpu.memory_space<semaphore_mem>> -> memref<1x!tpu.dma_semaphore, #tpu.memory_space<semaphore_mem>>
    %99 = tpu.memref_squeeze %98 : memref<1x!tpu.dma_semaphore, #tpu.memory_space<semaphore_mem>> -> memref<!tpu.dma_semaphore, #tpu.memory_space<semaphore_mem>>
    tpu.enqueue_dma source(%96 : memref<1x128xf32, #tpu.memory_space<any>>) target(%97 : memref<1x128xf32, #tpu.memory_space<vmem>>) target_semaphore(%99 : memref<!tpu.dma_semaphore, #tpu.memory_space<semaphore_mem>>)
    %c20 = arith.constant 20 : index
    %100 = memref.load %arg1[%c20] : memref<32xi32, #tpu.memory_space<smem>>
    %c20_i32 = arith.constant 20 : i32
    %c0_i32_60 = arith.constant 0 : i32
    %101 = tpu.memref_slice %arg3[%100, %c0_i32_60] : memref<512x128xf32, #tpu.memory_space<any>> -> memref<1x128xf32, #tpu.memory_space<any>>
    %c20_i32_61 = arith.constant 20 : i32
    %c0_i32_62 = arith.constant 0 : i32
    %102 = tpu.memref_slice %arg5[%c20_i32_61, %c0_i32_62] : memref<32x128xf32, #tpu.memory_space<vmem>> -> memref<1x128xf32, #tpu.memory_space<vmem>>
    %103 = tpu.memref_slice %arg6[%c20_i32] : memref<32x!tpu.dma_semaphore, #tpu.memory_space<semaphore_mem>> -> memref<1x!tpu.dma_semaphore, #tpu.memory_space<semaphore_mem>>
    %104 = tpu.memref_squeeze %103 : memref<1x!tpu.dma_semaphore, #tpu.memory_space<semaphore_mem>> -> memref<!tpu.dma_semaphore, #tpu.memory_space<semaphore_mem>>
    tpu.enqueue_dma source(%101 : memref<1x128xf32, #tpu.memory_space<any>>) target(%102 : memref<1x128xf32, #tpu.memory_space<vmem>>) target_semaphore(%104 : memref<!tpu.dma_semaphore, #tpu.memory_space<semaphore_mem>>)
    %c21 = arith.constant 21 : index
    %105 = memref.load %arg1[%c21] : memref<32xi32, #tpu.memory_space<smem>>
    %c21_i32 = arith.constant 21 : i32
    %c0_i32_63 = arith.constant 0 : i32
    %106 = tpu.memref_slice %arg3[%105, %c0_i32_63] : memref<512x128xf32, #tpu.memory_space<any>> -> memref<1x128xf32, #tpu.memory_space<any>>
    %c21_i32_64 = arith.constant 21 : i32
    %c0_i32_65 = arith.constant 0 : i32
    %107 = tpu.memref_slice %arg5[%c21_i32_64, %c0_i32_65] : memref<32x128xf32, #tpu.memory_space<vmem>> -> memref<1x128xf32, #tpu.memory_space<vmem>>
    %108 = tpu.memref_slice %arg6[%c21_i32] : memref<32x!tpu.dma_semaphore, #tpu.memory_space<semaphore_mem>> -> memref<1x!tpu.dma_semaphore, #tpu.memory_space<semaphore_mem>>
    %109 = tpu.memref_squeeze %108 : memref<1x!tpu.dma_semaphore, #tpu.memory_space<semaphore_mem>> -> memref<!tpu.dma_semaphore, #tpu.memory_space<semaphore_mem>>
    tpu.enqueue_dma source(%106 : memref<1x128xf32, #tpu.memory_space<any>>) target(%107 : memref<1x128xf32, #tpu.memory_space<vmem>>) target_semaphore(%109 : memref<!tpu.dma_semaphore, #tpu.memory_space<semaphore_mem>>)
    %c22 = arith.constant 22 : index
    %110 = memref.load %arg1[%c22] : memref<32xi32, #tpu.memory_space<smem>>
    %c22_i32 = arith.constant 22 : i32
    %c0_i32_66 = arith.constant 0 : i32
    %111 = tpu.memref_slice %arg3[%110, %c0_i32_66] : memref<512x128xf32, #tpu.memory_space<any>> -> memref<1x128xf32, #tpu.memory_space<any>>
    %c22_i32_67 = arith.constant 22 : i32
    %c0_i32_68 = arith.constant 0 : i32
    %112 = tpu.memref_slice %arg5[%c22_i32_67, %c0_i32_68] : memref<32x128xf32, #tpu.memory_space<vmem>> -> memref<1x128xf32, #tpu.memory_space<vmem>>
    %113 = tpu.memref_slice %arg6[%c22_i32] : memref<32x!tpu.dma_semaphore, #tpu.memory_space<semaphore_mem>> -> memref<1x!tpu.dma_semaphore, #tpu.memory_space<semaphore_mem>>
    %114 = tpu.memref_squeeze %113 : memref<1x!tpu.dma_semaphore, #tpu.memory_space<semaphore_mem>> -> memref<!tpu.dma_semaphore, #tpu.memory_space<semaphore_mem>>
    tpu.enqueue_dma source(%111 : memref<1x128xf32, #tpu.memory_space<any>>) target(%112 : memref<1x128xf32, #tpu.memory_space<vmem>>) target_semaphore(%114 : memref<!tpu.dma_semaphore, #tpu.memory_space<semaphore_mem>>)
    %c23 = arith.constant 23 : index
    %115 = memref.load %arg1[%c23] : memref<32xi32, #tpu.memory_space<smem>>
    %c23_i32 = arith.constant 23 : i32
    %c0_i32_69 = arith.constant 0 : i32
    %116 = tpu.memref_slice %arg3[%115, %c0_i32_69] : memref<512x128xf32, #tpu.memory_space<any>> -> memref<1x128xf32, #tpu.memory_space<any>>
    %c23_i32_70 = arith.constant 23 : i32
    %c0_i32_71 = arith.constant 0 : i32
    %117 = tpu.memref_slice %arg5[%c23_i32_70, %c0_i32_71] : memref<32x128xf32, #tpu.memory_space<vmem>> -> memref<1x128xf32, #tpu.memory_space<vmem>>
    %118 = tpu.memref_slice %arg6[%c23_i32] : memref<32x!tpu.dma_semaphore, #tpu.memory_space<semaphore_mem>> -> memref<1x!tpu.dma_semaphore, #tpu.memory_space<semaphore_mem>>
    %119 = tpu.memref_squeeze %118 : memref<1x!tpu.dma_semaphore, #tpu.memory_space<semaphore_mem>> -> memref<!tpu.dma_semaphore, #tpu.memory_space<semaphore_mem>>
    tpu.enqueue_dma source(%116 : memref<1x128xf32, #tpu.memory_space<any>>) target(%117 : memref<1x128xf32, #tpu.memory_space<vmem>>) target_semaphore(%119 : memref<!tpu.dma_semaphore, #tpu.memory_space<semaphore_mem>>)
    %c24 = arith.constant 24 : index
    %120 = memref.load %arg1[%c24] : memref<32xi32, #tpu.memory_space<smem>>
    %c24_i32 = arith.constant 24 : i32
    %c0_i32_72 = arith.constant 0 : i32
    %121 = tpu.memref_slice %arg3[%120, %c0_i32_72] : memref<512x128xf32, #tpu.memory_space<any>> -> memref<1x128xf32, #tpu.memory_space<any>>
    %c24_i32_73 = arith.constant 24 : i32
    %c0_i32_74 = arith.constant 0 : i32
    %122 = tpu.memref_slice %arg5[%c24_i32_73, %c0_i32_74] : memref<32x128xf32, #tpu.memory_space<vmem>> -> memref<1x128xf32, #tpu.memory_space<vmem>>
    %123 = tpu.memref_slice %arg6[%c24_i32] : memref<32x!tpu.dma_semaphore, #tpu.memory_space<semaphore_mem>> -> memref<1x!tpu.dma_semaphore, #tpu.memory_space<semaphore_mem>>
    %124 = tpu.memref_squeeze %123 : memref<1x!tpu.dma_semaphore, #tpu.memory_space<semaphore_mem>> -> memref<!tpu.dma_semaphore, #tpu.memory_space<semaphore_mem>>
    tpu.enqueue_dma source(%121 : memref<1x128xf32, #tpu.memory_space<any>>) target(%122 : memref<1x128xf32, #tpu.memory_space<vmem>>) target_semaphore(%124 : memref<!tpu.dma_semaphore, #tpu.memory_space<semaphore_mem>>)
    %c25 = arith.constant 25 : index
    %125 = memref.load %arg1[%c25] : memref<32xi32, #tpu.memory_space<smem>>
    %c25_i32 = arith.constant 25 : i32
    %c0_i32_75 = arith.constant 0 : i32
    %126 = tpu.memref_slice %arg3[%125, %c0_i32_75] : memref<512x128xf32, #tpu.memory_space<any>> -> memref<1x128xf32, #tpu.memory_space<any>>
    %c25_i32_76 = arith.constant 25 : i32
    %c0_i32_77 = arith.constant 0 : i32
    %127 = tpu.memref_slice %arg5[%c25_i32_76, %c0_i32_77] : memref<32x128xf32, #tpu.memory_space<vmem>> -> memref<1x128xf32, #tpu.memory_space<vmem>>
    %128 = tpu.memref_slice %arg6[%c25_i32] : memref<32x!tpu.dma_semaphore, #tpu.memory_space<semaphore_mem>> -> memref<1x!tpu.dma_semaphore, #tpu.memory_space<semaphore_mem>>
    %129 = tpu.memref_squeeze %128 : memref<1x!tpu.dma_semaphore, #tpu.memory_space<semaphore_mem>> -> memref<!tpu.dma_semaphore, #tpu.memory_space<semaphore_mem>>
    tpu.enqueue_dma source(%126 : memref<1x128xf32, #tpu.memory_space<any>>) target(%127 : memref<1x128xf32, #tpu.memory_space<vmem>>) target_semaphore(%129 : memref<!tpu.dma_semaphore, #tpu.memory_space<semaphore_mem>>)
    %c26 = arith.constant 26 : index
    %130 = memref.load %arg1[%c26] : memref<32xi32, #tpu.memory_space<smem>>
    %c26_i32 = arith.constant 26 : i32
    %c0_i32_78 = arith.constant 0 : i32
    %131 = tpu.memref_slice %arg3[%130, %c0_i32_78] : memref<512x128xf32, #tpu.memory_space<any>> -> memref<1x128xf32, #tpu.memory_space<any>>
    %c26_i32_79 = arith.constant 26 : i32
    %c0_i32_80 = arith.constant 0 : i32
    %132 = tpu.memref_slice %arg5[%c26_i32_79, %c0_i32_80] : memref<32x128xf32, #tpu.memory_space<vmem>> -> memref<1x128xf32, #tpu.memory_space<vmem>>
    %133 = tpu.memref_slice %arg6[%c26_i32] : memref<32x!tpu.dma_semaphore, #tpu.memory_space<semaphore_mem>> -> memref<1x!tpu.dma_semaphore, #tpu.memory_space<semaphore_mem>>
    %134 = tpu.memref_squeeze %133 : memref<1x!tpu.dma_semaphore, #tpu.memory_space<semaphore_mem>> -> memref<!tpu.dma_semaphore, #tpu.memory_space<semaphore_mem>>
    tpu.enqueue_dma source(%131 : memref<1x128xf32, #tpu.memory_space<any>>) target(%132 : memref<1x128xf32, #tpu.memory_space<vmem>>) target_semaphore(%134 : memref<!tpu.dma_semaphore, #tpu.memory_space<semaphore_mem>>)
    %c27 = arith.constant 27 : index
    %135 = memref.load %arg1[%c27] : memref<32xi32, #tpu.memory_space<smem>>
    %c27_i32 = arith.constant 27 : i32
    %c0_i32_81 = arith.constant 0 : i32
    %136 = tpu.memref_slice %arg3[%135, %c0_i32_81] : memref<512x128xf32, #tpu.memory_space<any>> -> memref<1x128xf32, #tpu.memory_space<any>>
    %c27_i32_82 = arith.constant 27 : i32
    %c0_i32_83 = arith.constant 0 : i32
    %137 = tpu.memref_slice %arg5[%c27_i32_82, %c0_i32_83] : memref<32x128xf32, #tpu.memory_space<vmem>> -> memref<1x128xf32, #tpu.memory_space<vmem>>
    %138 = tpu.memref_slice %arg6[%c27_i32] : memref<32x!tpu.dma_semaphore, #tpu.memory_space<semaphore_mem>> -> memref<1x!tpu.dma_semaphore, #tpu.memory_space<semaphore_mem>>
    %139 = tpu.memref_squeeze %138 : memref<1x!tpu.dma_semaphore, #tpu.memory_space<semaphore_mem>> -> memref<!tpu.dma_semaphore, #tpu.memory_space<semaphore_mem>>
    tpu.enqueue_dma source(%136 : memref<1x128xf32, #tpu.memory_space<any>>) target(%137 : memref<1x128xf32, #tpu.memory_space<vmem>>) target_semaphore(%139 : memref<!tpu.dma_semaphore, #tpu.memory_space<semaphore_mem>>)
    %c28 = arith.constant 28 : index
    %140 = memref.load %arg1[%c28] : memref<32xi32, #tpu.memory_space<smem>>
    %c28_i32 = arith.constant 28 : i32
    %c0_i32_84 = arith.constant 0 : i32
    %141 = tpu.memref_slice %arg3[%140, %c0_i32_84] : memref<512x128xf32, #tpu.memory_space<any>> -> memref<1x128xf32, #tpu.memory_space<any>>
    %c28_i32_85 = arith.constant 28 : i32
    %c0_i32_86 = arith.constant 0 : i32
    %142 = tpu.memref_slice %arg5[%c28_i32_85, %c0_i32_86] : memref<32x128xf32, #tpu.memory_space<vmem>> -> memref<1x128xf32, #tpu.memory_space<vmem>>
    %143 = tpu.memref_slice %arg6[%c28_i32] : memref<32x!tpu.dma_semaphore, #tpu.memory_space<semaphore_mem>> -> memref<1x!tpu.dma_semaphore, #tpu.memory_space<semaphore_mem>>
    %144 = tpu.memref_squeeze %143 : memref<1x!tpu.dma_semaphore, #tpu.memory_space<semaphore_mem>> -> memref<!tpu.dma_semaphore, #tpu.memory_space<semaphore_mem>>
    tpu.enqueue_dma source(%141 : memref<1x128xf32, #tpu.memory_space<any>>) target(%142 : memref<1x128xf32, #tpu.memory_space<vmem>>) target_semaphore(%144 : memref<!tpu.dma_semaphore, #tpu.memory_space<semaphore_mem>>)
    %c29 = arith.constant 29 : index
    %145 = memref.load %arg1[%c29] : memref<32xi32, #tpu.memory_space<smem>>
    %c29_i32 = arith.constant 29 : i32
    %c0_i32_87 = arith.constant 0 : i32
    %146 = tpu.memref_slice %arg3[%145, %c0_i32_87] : memref<512x128xf32, #tpu.memory_space<any>> -> memref<1x128xf32, #tpu.memory_space<any>>
    %c29_i32_88 = arith.constant 29 : i32
    %c0_i32_89 = arith.constant 0 : i32
    %147 = tpu.memref_slice %arg5[%c29_i32_88, %c0_i32_89] : memref<32x128xf32, #tpu.memory_space<vmem>> -> memref<1x128xf32, #tpu.memory_space<vmem>>
    %148 = tpu.memref_slice %arg6[%c29_i32] : memref<32x!tpu.dma_semaphore, #tpu.memory_space<semaphore_mem>> -> memref<1x!tpu.dma_semaphore, #tpu.memory_space<semaphore_mem>>
    %149 = tpu.memref_squeeze %148 : memref<1x!tpu.dma_semaphore, #tpu.memory_space<semaphore_mem>> -> memref<!tpu.dma_semaphore, #tpu.memory_space<semaphore_mem>>
    tpu.enqueue_dma source(%146 : memref<1x128xf32, #tpu.memory_space<any>>) target(%147 : memref<1x128xf32, #tpu.memory_space<vmem>>) target_semaphore(%149 : memref<!tpu.dma_semaphore, #tpu.memory_space<semaphore_mem>>)
    %c30 = arith.constant 30 : index
    %150 = memref.load %arg1[%c30] : memref<32xi32, #tpu.memory_space<smem>>
    %c30_i32 = arith.constant 30 : i32
    %c0_i32_90 = arith.constant 0 : i32
    %151 = tpu.memref_slice %arg3[%150, %c0_i32_90] : memref<512x128xf32, #tpu.memory_space<any>> -> memref<1x128xf32, #tpu.memory_space<any>>
    %c30_i32_91 = arith.constant 30 : i32
    %c0_i32_92 = arith.constant 0 : i32
    %152 = tpu.memref_slice %arg5[%c30_i32_91, %c0_i32_92] : memref<32x128xf32, #tpu.memory_space<vmem>> -> memref<1x128xf32, #tpu.memory_space<vmem>>
    %153 = tpu.memref_slice %arg6[%c30_i32] : memref<32x!tpu.dma_semaphore, #tpu.memory_space<semaphore_mem>> -> memref<1x!tpu.dma_semaphore, #tpu.memory_space<semaphore_mem>>
    %154 = tpu.memref_squeeze %153 : memref<1x!tpu.dma_semaphore, #tpu.memory_space<semaphore_mem>> -> memref<!tpu.dma_semaphore, #tpu.memory_space<semaphore_mem>>
    tpu.enqueue_dma source(%151 : memref<1x128xf32, #tpu.memory_space<any>>) target(%152 : memref<1x128xf32, #tpu.memory_space<vmem>>) target_semaphore(%154 : memref<!tpu.dma_semaphore, #tpu.memory_space<semaphore_mem>>)
    %c31 = arith.constant 31 : index
    %155 = memref.load %arg1[%c31] : memref<32xi32, #tpu.memory_space<smem>>
    %c31_i32 = arith.constant 31 : i32
    %c0_i32_93 = arith.constant 0 : i32
    %156 = tpu.memref_slice %arg3[%155, %c0_i32_93] : memref<512x128xf32, #tpu.memory_space<any>> -> memref<1x128xf32, #tpu.memory_space<any>>
    %c31_i32_94 = arith.constant 31 : i32
    %c0_i32_95 = arith.constant 0 : i32
    %157 = tpu.memref_slice %arg5[%c31_i32_94, %c0_i32_95] : memref<32x128xf32, #tpu.memory_space<vmem>> -> memref<1x128xf32, #tpu.memory_space<vmem>>
    %158 = tpu.memref_slice %arg6[%c31_i32] : memref<32x!tpu.dma_semaphore, #tpu.memory_space<semaphore_mem>> -> memref<1x!tpu.dma_semaphore, #tpu.memory_space<semaphore_mem>>
    %159 = tpu.memref_squeeze %158 : memref<1x!tpu.dma_semaphore, #tpu.memory_space<semaphore_mem>> -> memref<!tpu.dma_semaphore, #tpu.memory_space<semaphore_mem>>
    tpu.enqueue_dma source(%156 : memref<1x128xf32, #tpu.memory_space<any>>) target(%157 : memref<1x128xf32, #tpu.memory_space<vmem>>) target_semaphore(%159 : memref<!tpu.dma_semaphore, #tpu.memory_space<semaphore_mem>>)
    %c0_i32_96 = arith.constant 0 : i32
    %c0_i32_97 = arith.constant 0 : i32
    %c0_i32_98 = arith.constant 0 : i32
    %160 = tpu.memref_slice %arg3[%c0_i32_97, %c0_i32_98] : memref<512x128xf32, #tpu.memory_space<any>> -> memref<1x128xf32, #tpu.memory_space<any>>
    %c0_i32_99 = arith.constant 0 : i32
    %c0_i32_100 = arith.constant 0 : i32
    %161 = tpu.memref_slice %arg5[%c0_i32_99, %c0_i32_100] : memref<32x128xf32, #tpu.memory_space<vmem>> -> memref<1x128xf32, #tpu.memory_space<vmem>>
    %162 = tpu.memref_slice %arg6[%c0_i32_96] : memref<32x!tpu.dma_semaphore, #tpu.memory_space<semaphore_mem>> -> memref<1x!tpu.dma_semaphore, #tpu.memory_space<semaphore_mem>>
    %163 = tpu.memref_squeeze %162 : memref<1x!tpu.dma_semaphore, #tpu.memory_space<semaphore_mem>> -> memref<!tpu.dma_semaphore, #tpu.memory_space<semaphore_mem>>
    tpu.wait_dma2 semaphore(%163 : memref<!tpu.dma_semaphore, #tpu.memory_space<semaphore_mem>>) src(%160 : memref<1x128xf32, #tpu.memory_space<any>>) dst(%161 : memref<1x128xf32, #tpu.memory_space<vmem>>)
    %c1_i32_101 = arith.constant 1 : i32
    %c0_i32_102 = arith.constant 0 : i32
    %c0_i32_103 = arith.constant 0 : i32
    %164 = tpu.memref_slice %arg3[%c0_i32_102, %c0_i32_103] : memref<512x128xf32, #tpu.memory_space<any>> -> memref<1x128xf32, #tpu.memory_space<any>>
    %c1_i32_104 = arith.constant 1 : i32
    %c0_i32_105 = arith.constant 0 : i32
    %165 = tpu.memref_slice %arg5[%c1_i32_104, %c0_i32_105] : memref<32x128xf32, #tpu.memory_space<vmem>> -> memref<1x128xf32, #tpu.memory_space<vmem>>
    %166 = tpu.memref_slice %arg6[%c1_i32_101] : memref<32x!tpu.dma_semaphore, #tpu.memory_space<semaphore_mem>> -> memref<1x!tpu.dma_semaphore, #tpu.memory_space<semaphore_mem>>
    %167 = tpu.memref_squeeze %166 : memref<1x!tpu.dma_semaphore, #tpu.memory_space<semaphore_mem>> -> memref<!tpu.dma_semaphore, #tpu.memory_space<semaphore_mem>>
    tpu.wait_dma2 semaphore(%167 : memref<!tpu.dma_semaphore, #tpu.memory_space<semaphore_mem>>) src(%164 : memref<1x128xf32, #tpu.memory_space<any>>) dst(%165 : memref<1x128xf32, #tpu.memory_space<vmem>>)
    %c2_i32_106 = arith.constant 2 : i32
    %c0_i32_107 = arith.constant 0 : i32
    %c0_i32_108 = arith.constant 0 : i32
    %168 = tpu.memref_slice %arg3[%c0_i32_107, %c0_i32_108] : memref<512x128xf32, #tpu.memory_space<any>> -> memref<1x128xf32, #tpu.memory_space<any>>
    %c2_i32_109 = arith.constant 2 : i32
    %c0_i32_110 = arith.constant 0 : i32
    %169 = tpu.memref_slice %arg5[%c2_i32_109, %c0_i32_110] : memref<32x128xf32, #tpu.memory_space<vmem>> -> memref<1x128xf32, #tpu.memory_space<vmem>>
    %170 = tpu.memref_slice %arg6[%c2_i32_106] : memref<32x!tpu.dma_semaphore, #tpu.memory_space<semaphore_mem>> -> memref<1x!tpu.dma_semaphore, #tpu.memory_space<semaphore_mem>>
    %171 = tpu.memref_squeeze %170 : memref<1x!tpu.dma_semaphore, #tpu.memory_space<semaphore_mem>> -> memref<!tpu.dma_semaphore, #tpu.memory_space<semaphore_mem>>
    tpu.wait_dma2 semaphore(%171 : memref<!tpu.dma_semaphore, #tpu.memory_space<semaphore_mem>>) src(%168 : memref<1x128xf32, #tpu.memory_space<any>>) dst(%169 : memref<1x128xf32, #tpu.memory_space<vmem>>)
    %c3_i32_111 = arith.constant 3 : i32
    %c0_i32_112 = arith.constant 0 : i32
    %c0_i32_113 = arith.constant 0 : i32
    %172 = tpu.memref_slice %arg3[%c0_i32_112, %c0_i32_113] : memref<512x128xf32, #tpu.memory_space<any>> -> memref<1x128xf32, #tpu.memory_space<any>>
    %c3_i32_114 = arith.constant 3 : i32
    %c0_i32_115 = arith.constant 0 : i32
    %173 = tpu.memref_slice %arg5[%c3_i32_114, %c0_i32_115] : memref<32x128xf32, #tpu.memory_space<vmem>> -> memref<1x128xf32, #tpu.memory_space<vmem>>
    %174 = tpu.memref_slice %arg6[%c3_i32_111] : memref<32x!tpu.dma_semaphore, #tpu.memory_space<semaphore_mem>> -> memref<1x!tpu.dma_semaphore, #tpu.memory_space<semaphore_mem>>
    %175 = tpu.memref_squeeze %174 : memref<1x!tpu.dma_semaphore, #tpu.memory_space<semaphore_mem>> -> memref<!tpu.dma_semaphore, #tpu.memory_space<semaphore_mem>>
    tpu.wait_dma2 semaphore(%175 : memref<!tpu.dma_semaphore, #tpu.memory_space<semaphore_mem>>) src(%172 : memref<1x128xf32, #tpu.memory_space<any>>) dst(%173 : memref<1x128xf32, #tpu.memory_space<vmem>>)
    %c4_i32_116 = arith.constant 4 : i32
    %c0_i32_117 = arith.constant 0 : i32
    %c0_i32_118 = arith.constant 0 : i32
    %176 = tpu.memref_slice %arg3[%c0_i32_117, %c0_i32_118] : memref<512x128xf32, #tpu.memory_space<any>> -> memref<1x128xf32, #tpu.memory_space<any>>
    %c4_i32_119 = arith.constant 4 : i32
    %c0_i32_120 = arith.constant 0 : i32
    %177 = tpu.memref_slice %arg5[%c4_i32_119, %c0_i32_120] : memref<32x128xf32, #tpu.memory_space<vmem>> -> memref<1x128xf32, #tpu.memory_space<vmem>>
    %178 = tpu.memref_slice %arg6[%c4_i32_116] : memref<32x!tpu.dma_semaphore, #tpu.memory_space<semaphore_mem>> -> memref<1x!tpu.dma_semaphore, #tpu.memory_space<semaphore_mem>>
    %179 = tpu.memref_squeeze %178 : memref<1x!tpu.dma_semaphore, #tpu.memory_space<semaphore_mem>> -> memref<!tpu.dma_semaphore, #tpu.memory_space<semaphore_mem>>
    tpu.wait_dma2 semaphore(%179 : memref<!tpu.dma_semaphore, #tpu.memory_space<semaphore_mem>>) src(%176 : memref<1x128xf32, #tpu.memory_space<any>>) dst(%177 : memref<1x128xf32, #tpu.memory_space<vmem>>)
    %c5_i32_121 = arith.constant 5 : i32
    %c0_i32_122 = arith.constant 0 : i32
    %c0_i32_123 = arith.constant 0 : i32
    %180 = tpu.memref_slice %arg3[%c0_i32_122, %c0_i32_123] : memref<512x128xf32, #tpu.memory_space<any>> -> memref<1x128xf32, #tpu.memory_space<any>>
    %c5_i32_124 = arith.constant 5 : i32
    %c0_i32_125 = arith.constant 0 : i32
    %181 = tpu.memref_slice %arg5[%c5_i32_124, %c0_i32_125] : memref<32x128xf32, #tpu.memory_space<vmem>> -> memref<1x128xf32, #tpu.memory_space<vmem>>
    %182 = tpu.memref_slice %arg6[%c5_i32_121] : memref<32x!tpu.dma_semaphore, #tpu.memory_space<semaphore_mem>> -> memref<1x!tpu.dma_semaphore, #tpu.memory_space<semaphore_mem>>
    %183 = tpu.memref_squeeze %182 : memref<1x!tpu.dma_semaphore, #tpu.memory_space<semaphore_mem>> -> memref<!tpu.dma_semaphore, #tpu.memory_space<semaphore_mem>>
    tpu.wait_dma2 semaphore(%183 : memref<!tpu.dma_semaphore, #tpu.memory_space<semaphore_mem>>) src(%180 : memref<1x128xf32, #tpu.memory_space<any>>) dst(%181 : memref<1x128xf32, #tpu.memory_space<vmem>>)
    %c6_i32_126 = arith.constant 6 : i32
    %c0_i32_127 = arith.constant 0 : i32
    %c0_i32_128 = arith.constant 0 : i32
    %184 = tpu.memref_slice %arg3[%c0_i32_127, %c0_i32_128] : memref<512x128xf32, #tpu.memory_space<any>> -> memref<1x128xf32, #tpu.memory_space<any>>
    %c6_i32_129 = arith.constant 6 : i32
    %c0_i32_130 = arith.constant 0 : i32
    %185 = tpu.memref_slice %arg5[%c6_i32_129, %c0_i32_130] : memref<32x128xf32, #tpu.memory_space<vmem>> -> memref<1x128xf32, #tpu.memory_space<vmem>>
    %186 = tpu.memref_slice %arg6[%c6_i32_126] : memref<32x!tpu.dma_semaphore, #tpu.memory_space<semaphore_mem>> -> memref<1x!tpu.dma_semaphore, #tpu.memory_space<semaphore_mem>>
    %187 = tpu.memref_squeeze %186 : memref<1x!tpu.dma_semaphore, #tpu.memory_space<semaphore_mem>> -> memref<!tpu.dma_semaphore, #tpu.memory_space<semaphore_mem>>
    tpu.wait_dma2 semaphore(%187 : memref<!tpu.dma_semaphore, #tpu.memory_space<semaphore_mem>>) src(%184 : memref<1x128xf32, #tpu.memory_space<any>>) dst(%185 : memref<1x128xf32, #tpu.memory_space<vmem>>)
    %c7_i32_131 = arith.constant 7 : i32
    %c0_i32_132 = arith.constant 0 : i32
    %c0_i32_133 = arith.constant 0 : i32
    %188 = tpu.memref_slice %arg3[%c0_i32_132, %c0_i32_133] : memref<512x128xf32, #tpu.memory_space<any>> -> memref<1x128xf32, #tpu.memory_space<any>>
    %c7_i32_134 = arith.constant 7 : i32
    %c0_i32_135 = arith.constant 0 : i32
    %189 = tpu.memref_slice %arg5[%c7_i32_134, %c0_i32_135] : memref<32x128xf32, #tpu.memory_space<vmem>> -> memref<1x128xf32, #tpu.memory_space<vmem>>
    %190 = tpu.memref_slice %arg6[%c7_i32_131] : memref<32x!tpu.dma_semaphore, #tpu.memory_space<semaphore_mem>> -> memref<1x!tpu.dma_semaphore, #tpu.memory_space<semaphore_mem>>
    %191 = tpu.memref_squeeze %190 : memref<1x!tpu.dma_semaphore, #tpu.memory_space<semaphore_mem>> -> memref<!tpu.dma_semaphore, #tpu.memory_space<semaphore_mem>>
    tpu.wait_dma2 semaphore(%191 : memref<!tpu.dma_semaphore, #tpu.memory_space<semaphore_mem>>) src(%188 : memref<1x128xf32, #tpu.memory_space<any>>) dst(%189 : memref<1x128xf32, #tpu.memory_space<vmem>>)
    %c8_i32_136 = arith.constant 8 : i32
    %c0_i32_137 = arith.constant 0 : i32
    %c0_i32_138 = arith.constant 0 : i32
    %192 = tpu.memref_slice %arg3[%c0_i32_137, %c0_i32_138] : memref<512x128xf32, #tpu.memory_space<any>> -> memref<1x128xf32, #tpu.memory_space<any>>
    %c8_i32_139 = arith.constant 8 : i32
    %c0_i32_140 = arith.constant 0 : i32
    %193 = tpu.memref_slice %arg5[%c8_i32_139, %c0_i32_140] : memref<32x128xf32, #tpu.memory_space<vmem>> -> memref<1x128xf32, #tpu.memory_space<vmem>>
    %194 = tpu.memref_slice %arg6[%c8_i32_136] : memref<32x!tpu.dma_semaphore, #tpu.memory_space<semaphore_mem>> -> memref<1x!tpu.dma_semaphore, #tpu.memory_space<semaphore_mem>>
    %195 = tpu.memref_squeeze %194 : memref<1x!tpu.dma_semaphore, #tpu.memory_space<semaphore_mem>> -> memref<!tpu.dma_semaphore, #tpu.memory_space<semaphore_mem>>
    tpu.wait_dma2 semaphore(%195 : memref<!tpu.dma_semaphore, #tpu.memory_space<semaphore_mem>>) src(%192 : memref<1x128xf32, #tpu.memory_space<any>>) dst(%193 : memref<1x128xf32, #tpu.memory_space<vmem>>)
    %c9_i32_141 = arith.constant 9 : i32
    %c0_i32_142 = arith.constant 0 : i32
    %c0_i32_143 = arith.constant 0 : i32
    %196 = tpu.memref_slice %arg3[%c0_i32_142, %c0_i32_143] : memref<512x128xf32, #tpu.memory_space<any>> -> memref<1x128xf32, #tpu.memory_space<any>>
    %c9_i32_144 = arith.constant 9 : i32
    %c0_i32_145 = arith.constant 0 : i32
    %197 = tpu.memref_slice %arg5[%c9_i32_144, %c0_i32_145] : memref<32x128xf32, #tpu.memory_space<vmem>> -> memref<1x128xf32, #tpu.memory_space<vmem>>
    %198 = tpu.memref_slice %arg6[%c9_i32_141] : memref<32x!tpu.dma_semaphore, #tpu.memory_space<semaphore_mem>> -> memref<1x!tpu.dma_semaphore, #tpu.memory_space<semaphore_mem>>
    %199 = tpu.memref_squeeze %198 : memref<1x!tpu.dma_semaphore, #tpu.memory_space<semaphore_mem>> -> memref<!tpu.dma_semaphore, #tpu.memory_space<semaphore_mem>>
    tpu.wait_dma2 semaphore(%199 : memref<!tpu.dma_semaphore, #tpu.memory_space<semaphore_mem>>) src(%196 : memref<1x128xf32, #tpu.memory_space<any>>) dst(%197 : memref<1x128xf32, #tpu.memory_space<vmem>>)
    %c10_i32_146 = arith.constant 10 : i32
    %c0_i32_147 = arith.constant 0 : i32
    %c0_i32_148 = arith.constant 0 : i32
    %200 = tpu.memref_slice %arg3[%c0_i32_147, %c0_i32_148] : memref<512x128xf32, #tpu.memory_space<any>> -> memref<1x128xf32, #tpu.memory_space<any>>
    %c10_i32_149 = arith.constant 10 : i32
    %c0_i32_150 = arith.constant 0 : i32
    %201 = tpu.memref_slice %arg5[%c10_i32_149, %c0_i32_150] : memref<32x128xf32, #tpu.memory_space<vmem>> -> memref<1x128xf32, #tpu.memory_space<vmem>>
    %202 = tpu.memref_slice %arg6[%c10_i32_146] : memref<32x!tpu.dma_semaphore, #tpu.memory_space<semaphore_mem>> -> memref<1x!tpu.dma_semaphore, #tpu.memory_space<semaphore_mem>>
    %203 = tpu.memref_squeeze %202 : memref<1x!tpu.dma_semaphore, #tpu.memory_space<semaphore_mem>> -> memref<!tpu.dma_semaphore, #tpu.memory_space<semaphore_mem>>
    tpu.wait_dma2 semaphore(%203 : memref<!tpu.dma_semaphore, #tpu.memory_space<semaphore_mem>>) src(%200 : memref<1x128xf32, #tpu.memory_space<any>>) dst(%201 : memref<1x128xf32, #tpu.memory_space<vmem>>)
    %c11_i32_151 = arith.constant 11 : i32
    %c0_i32_152 = arith.constant 0 : i32
    %c0_i32_153 = arith.constant 0 : i32
    %204 = tpu.memref_slice %arg3[%c0_i32_152, %c0_i32_153] : memref<512x128xf32, #tpu.memory_space<any>> -> memref<1x128xf32, #tpu.memory_space<any>>
    %c11_i32_154 = arith.constant 11 : i32
    %c0_i32_155 = arith.constant 0 : i32
    %205 = tpu.memref_slice %arg5[%c11_i32_154, %c0_i32_155] : memref<32x128xf32, #tpu.memory_space<vmem>> -> memref<1x128xf32, #tpu.memory_space<vmem>>
    %206 = tpu.memref_slice %arg6[%c11_i32_151] : memref<32x!tpu.dma_semaphore, #tpu.memory_space<semaphore_mem>> -> memref<1x!tpu.dma_semaphore, #tpu.memory_space<semaphore_mem>>
    %207 = tpu.memref_squeeze %206 : memref<1x!tpu.dma_semaphore, #tpu.memory_space<semaphore_mem>> -> memref<!tpu.dma_semaphore, #tpu.memory_space<semaphore_mem>>
    tpu.wait_dma2 semaphore(%207 : memref<!tpu.dma_semaphore, #tpu.memory_space<semaphore_mem>>) src(%204 : memref<1x128xf32, #tpu.memory_space<any>>) dst(%205 : memref<1x128xf32, #tpu.memory_space<vmem>>)
    %c12_i32_156 = arith.constant 12 : i32
    %c0_i32_157 = arith.constant 0 : i32
    %c0_i32_158 = arith.constant 0 : i32
    %208 = tpu.memref_slice %arg3[%c0_i32_157, %c0_i32_158] : memref<512x128xf32, #tpu.memory_space<any>> -> memref<1x128xf32, #tpu.memory_space<any>>
    %c12_i32_159 = arith.constant 12 : i32
    %c0_i32_160 = arith.constant 0 : i32
    %209 = tpu.memref_slice %arg5[%c12_i32_159, %c0_i32_160] : memref<32x128xf32, #tpu.memory_space<vmem>> -> memref<1x128xf32, #tpu.memory_space<vmem>>
    %210 = tpu.memref_slice %arg6[%c12_i32_156] : memref<32x!tpu.dma_semaphore, #tpu.memory_space<semaphore_mem>> -> memref<1x!tpu.dma_semaphore, #tpu.memory_space<semaphore_mem>>
    %211 = tpu.memref_squeeze %210 : memref<1x!tpu.dma_semaphore, #tpu.memory_space<semaphore_mem>> -> memref<!tpu.dma_semaphore, #tpu.memory_space<semaphore_mem>>
    tpu.wait_dma2 semaphore(%211 : memref<!tpu.dma_semaphore, #tpu.memory_space<semaphore_mem>>) src(%208 : memref<1x128xf32, #tpu.memory_space<any>>) dst(%209 : memref<1x128xf32, #tpu.memory_space<vmem>>)
    %c13_i32_161 = arith.constant 13 : i32
    %c0_i32_162 = arith.constant 0 : i32
    %c0_i32_163 = arith.constant 0 : i32
    %212 = tpu.memref_slice %arg3[%c0_i32_162, %c0_i32_163] : memref<512x128xf32, #tpu.memory_space<any>> -> memref<1x128xf32, #tpu.memory_space<any>>
    %c13_i32_164 = arith.constant 13 : i32
    %c0_i32_165 = arith.constant 0 : i32
    %213 = tpu.memref_slice %arg5[%c13_i32_164, %c0_i32_165] : memref<32x128xf32, #tpu.memory_space<vmem>> -> memref<1x128xf32, #tpu.memory_space<vmem>>
    %214 = tpu.memref_slice %arg6[%c13_i32_161] : memref<32x!tpu.dma_semaphore, #tpu.memory_space<semaphore_mem>> -> memref<1x!tpu.dma_semaphore, #tpu.memory_space<semaphore_mem>>
    %215 = tpu.memref_squeeze %214 : memref<1x!tpu.dma_semaphore, #tpu.memory_space<semaphore_mem>> -> memref<!tpu.dma_semaphore, #tpu.memory_space<semaphore_mem>>
    tpu.wait_dma2 semaphore(%215 : memref<!tpu.dma_semaphore, #tpu.memory_space<semaphore_mem>>) src(%212 : memref<1x128xf32, #tpu.memory_space<any>>) dst(%213 : memref<1x128xf32, #tpu.memory_space<vmem>>)
    %c14_i32_166 = arith.constant 14 : i32
    %c0_i32_167 = arith.constant 0 : i32
    %c0_i32_168 = arith.constant 0 : i32
    %216 = tpu.memref_slice %arg3[%c0_i32_167, %c0_i32_168] : memref<512x128xf32, #tpu.memory_space<any>> -> memref<1x128xf32, #tpu.memory_space<any>>
    %c14_i32_169 = arith.constant 14 : i32
    %c0_i32_170 = arith.constant 0 : i32
    %217 = tpu.memref_slice %arg5[%c14_i32_169, %c0_i32_170] : memref<32x128xf32, #tpu.memory_space<vmem>> -> memref<1x128xf32, #tpu.memory_space<vmem>>
    %218 = tpu.memref_slice %arg6[%c14_i32_166] : memref<32x!tpu.dma_semaphore, #tpu.memory_space<semaphore_mem>> -> memref<1x!tpu.dma_semaphore, #tpu.memory_space<semaphore_mem>>
    %219 = tpu.memref_squeeze %218 : memref<1x!tpu.dma_semaphore, #tpu.memory_space<semaphore_mem>> -> memref<!tpu.dma_semaphore, #tpu.memory_space<semaphore_mem>>
    tpu.wait_dma2 semaphore(%219 : memref<!tpu.dma_semaphore, #tpu.memory_space<semaphore_mem>>) src(%216 : memref<1x128xf32, #tpu.memory_space<any>>) dst(%217 : memref<1x128xf32, #tpu.memory_space<vmem>>)
    %c15_i32_171 = arith.constant 15 : i32
    %c0_i32_172 = arith.constant 0 : i32
    %c0_i32_173 = arith.constant 0 : i32
    %220 = tpu.memref_slice %arg3[%c0_i32_172, %c0_i32_173] : memref<512x128xf32, #tpu.memory_space<any>> -> memref<1x128xf32, #tpu.memory_space<any>>
    %c15_i32_174 = arith.constant 15 : i32
    %c0_i32_175 = arith.constant 0 : i32
    %221 = tpu.memref_slice %arg5[%c15_i32_174, %c0_i32_175] : memref<32x128xf32, #tpu.memory_space<vmem>> -> memref<1x128xf32, #tpu.memory_space<vmem>>
    %222 = tpu.memref_slice %arg6[%c15_i32_171] : memref<32x!tpu.dma_semaphore, #tpu.memory_space<semaphore_mem>> -> memref<1x!tpu.dma_semaphore, #tpu.memory_space<semaphore_mem>>
    %223 = tpu.memref_squeeze %222 : memref<1x!tpu.dma_semaphore, #tpu.memory_space<semaphore_mem>> -> memref<!tpu.dma_semaphore, #tpu.memory_space<semaphore_mem>>
    tpu.wait_dma2 semaphore(%223 : memref<!tpu.dma_semaphore, #tpu.memory_space<semaphore_mem>>) src(%220 : memref<1x128xf32, #tpu.memory_space<any>>) dst(%221 : memref<1x128xf32, #tpu.memory_space<vmem>>)
    %c16_i32_176 = arith.constant 16 : i32
    %c0_i32_177 = arith.constant 0 : i32
    %c0_i32_178 = arith.constant 0 : i32
    %224 = tpu.memref_slice %arg3[%c0_i32_177, %c0_i32_178] : memref<512x128xf32, #tpu.memory_space<any>> -> memref<1x128xf32, #tpu.memory_space<any>>
    %c16_i32_179 = arith.constant 16 : i32
    %c0_i32_180 = arith.constant 0 : i32
    %225 = tpu.memref_slice %arg5[%c16_i32_179, %c0_i32_180] : memref<32x128xf32, #tpu.memory_space<vmem>> -> memref<1x128xf32, #tpu.memory_space<vmem>>
    %226 = tpu.memref_slice %arg6[%c16_i32_176] : memref<32x!tpu.dma_semaphore, #tpu.memory_space<semaphore_mem>> -> memref<1x!tpu.dma_semaphore, #tpu.memory_space<semaphore_mem>>
    %227 = tpu.memref_squeeze %226 : memref<1x!tpu.dma_semaphore, #tpu.memory_space<semaphore_mem>> -> memref<!tpu.dma_semaphore, #tpu.memory_space<semaphore_mem>>
    tpu.wait_dma2 semaphore(%227 : memref<!tpu.dma_semaphore, #tpu.memory_space<semaphore_mem>>) src(%224 : memref<1x128xf32, #tpu.memory_space<any>>) dst(%225 : memref<1x128xf32, #tpu.memory_space<vmem>>)
    %c17_i32_181 = arith.constant 17 : i32
    %c0_i32_182 = arith.constant 0 : i32
    %c0_i32_183 = arith.constant 0 : i32
    %228 = tpu.memref_slice %arg3[%c0_i32_182, %c0_i32_183] : memref<512x128xf32, #tpu.memory_space<any>> -> memref<1x128xf32, #tpu.memory_space<any>>
    %c17_i32_184 = arith.constant 17 : i32
    %c0_i32_185 = arith.constant 0 : i32
    %229 = tpu.memref_slice %arg5[%c17_i32_184, %c0_i32_185] : memref<32x128xf32, #tpu.memory_space<vmem>> -> memref<1x128xf32, #tpu.memory_space<vmem>>
    %230 = tpu.memref_slice %arg6[%c17_i32_181] : memref<32x!tpu.dma_semaphore, #tpu.memory_space<semaphore_mem>> -> memref<1x!tpu.dma_semaphore, #tpu.memory_space<semaphore_mem>>
    %231 = tpu.memref_squeeze %230 : memref<1x!tpu.dma_semaphore, #tpu.memory_space<semaphore_mem>> -> memref<!tpu.dma_semaphore, #tpu.memory_space<semaphore_mem>>
    tpu.wait_dma2 semaphore(%231 : memref<!tpu.dma_semaphore, #tpu.memory_space<semaphore_mem>>) src(%228 : memref<1x128xf32, #tpu.memory_space<any>>) dst(%229 : memref<1x128xf32, #tpu.memory_space<vmem>>)
    %c18_i32_186 = arith.constant 18 : i32
    %c0_i32_187 = arith.constant 0 : i32
    %c0_i32_188 = arith.constant 0 : i32
    %232 = tpu.memref_slice %arg3[%c0_i32_187, %c0_i32_188] : memref<512x128xf32, #tpu.memory_space<any>> -> memref<1x128xf32, #tpu.memory_space<any>>
    %c18_i32_189 = arith.constant 18 : i32
    %c0_i32_190 = arith.constant 0 : i32
    %233 = tpu.memref_slice %arg5[%c18_i32_189, %c0_i32_190] : memref<32x128xf32, #tpu.memory_space<vmem>> -> memref<1x128xf32, #tpu.memory_space<vmem>>
    %234 = tpu.memref_slice %arg6[%c18_i32_186] : memref<32x!tpu.dma_semaphore, #tpu.memory_space<semaphore_mem>> -> memref<1x!tpu.dma_semaphore, #tpu.memory_space<semaphore_mem>>
    %235 = tpu.memref_squeeze %234 : memref<1x!tpu.dma_semaphore, #tpu.memory_space<semaphore_mem>> -> memref<!tpu.dma_semaphore, #tpu.memory_space<semaphore_mem>>
    tpu.wait_dma2 semaphore(%235 : memref<!tpu.dma_semaphore, #tpu.memory_space<semaphore_mem>>) src(%232 : memref<1x128xf32, #tpu.memory_space<any>>) dst(%233 : memref<1x128xf32, #tpu.memory_space<vmem>>)
    %c19_i32_191 = arith.constant 19 : i32
    %c0_i32_192 = arith.constant 0 : i32
    %c0_i32_193 = arith.constant 0 : i32
    %236 = tpu.memref_slice %arg3[%c0_i32_192, %c0_i32_193] : memref<512x128xf32, #tpu.memory_space<any>> -> memref<1x128xf32, #tpu.memory_space<any>>
    %c19_i32_194 = arith.constant 19 : i32
    %c0_i32_195 = arith.constant 0 : i32
    %237 = tpu.memref_slice %arg5[%c19_i32_194, %c0_i32_195] : memref<32x128xf32, #tpu.memory_space<vmem>> -> memref<1x128xf32, #tpu.memory_space<vmem>>
    %238 = tpu.memref_slice %arg6[%c19_i32_191] : memref<32x!tpu.dma_semaphore, #tpu.memory_space<semaphore_mem>> -> memref<1x!tpu.dma_semaphore, #tpu.memory_space<semaphore_mem>>
    %239 = tpu.memref_squeeze %238 : memref<1x!tpu.dma_semaphore, #tpu.memory_space<semaphore_mem>> -> memref<!tpu.dma_semaphore, #tpu.memory_space<semaphore_mem>>
    tpu.wait_dma2 semaphore(%239 : memref<!tpu.dma_semaphore, #tpu.memory_space<semaphore_mem>>) src(%236 : memref<1x128xf32, #tpu.memory_space<any>>) dst(%237 : memref<1x128xf32, #tpu.memory_space<vmem>>)
    %c20_i32_196 = arith.constant 20 : i32
    %c0_i32_197 = arith.constant 0 : i32
    %c0_i32_198 = arith.constant 0 : i32
    %240 = tpu.memref_slice %arg3[%c0_i32_197, %c0_i32_198] : memref<512x128xf32, #tpu.memory_space<any>> -> memref<1x128xf32, #tpu.memory_space<any>>
    %c20_i32_199 = arith.constant 20 : i32
    %c0_i32_200 = arith.constant 0 : i32
    %241 = tpu.memref_slice %arg5[%c20_i32_199, %c0_i32_200] : memref<32x128xf32, #tpu.memory_space<vmem>> -> memref<1x128xf32, #tpu.memory_space<vmem>>
    %242 = tpu.memref_slice %arg6[%c20_i32_196] : memref<32x!tpu.dma_semaphore, #tpu.memory_space<semaphore_mem>> -> memref<1x!tpu.dma_semaphore, #tpu.memory_space<semaphore_mem>>
    %243 = tpu.memref_squeeze %242 : memref<1x!tpu.dma_semaphore, #tpu.memory_space<semaphore_mem>> -> memref<!tpu.dma_semaphore, #tpu.memory_space<semaphore_mem>>
    tpu.wait_dma2 semaphore(%243 : memref<!tpu.dma_semaphore, #tpu.memory_space<semaphore_mem>>) src(%240 : memref<1x128xf32, #tpu.memory_space<any>>) dst(%241 : memref<1x128xf32, #tpu.memory_space<vmem>>)
    %c21_i32_201 = arith.constant 21 : i32
    %c0_i32_202 = arith.constant 0 : i32
    %c0_i32_203 = arith.constant 0 : i32
    %244 = tpu.memref_slice %arg3[%c0_i32_202, %c0_i32_203] : memref<512x128xf32, #tpu.memory_space<any>> -> memref<1x128xf32, #tpu.memory_space<any>>
    %c21_i32_204 = arith.constant 21 : i32
    %c0_i32_205 = arith.constant 0 : i32
    %245 = tpu.memref_slice %arg5[%c21_i32_204, %c0_i32_205] : memref<32x128xf32, #tpu.memory_space<vmem>> -> memref<1x128xf32, #tpu.memory_space<vmem>>
    %246 = tpu.memref_slice %arg6[%c21_i32_201] : memref<32x!tpu.dma_semaphore, #tpu.memory_space<semaphore_mem>> -> memref<1x!tpu.dma_semaphore, #tpu.memory_space<semaphore_mem>>
    %247 = tpu.memref_squeeze %246 : memref<1x!tpu.dma_semaphore, #tpu.memory_space<semaphore_mem>> -> memref<!tpu.dma_semaphore, #tpu.memory_space<semaphore_mem>>
    tpu.wait_dma2 semaphore(%247 : memref<!tpu.dma_semaphore, #tpu.memory_space<semaphore_mem>>) src(%244 : memref<1x128xf32, #tpu.memory_space<any>>) dst(%245 : memref<1x128xf32, #tpu.memory_space<vmem>>)
    %c22_i32_206 = arith.constant 22 : i32
    %c0_i32_207 = arith.constant 0 : i32
    %c0_i32_208 = arith.constant 0 : i32
    %248 = tpu.memref_slice %arg3[%c0_i32_207, %c0_i32_208] : memref<512x128xf32, #tpu.memory_space<any>> -> memref<1x128xf32, #tpu.memory_space<any>>
    %c22_i32_209 = arith.constant 22 : i32
    %c0_i32_210 = arith.constant 0 : i32
    %249 = tpu.memref_slice %arg5[%c22_i32_209, %c0_i32_210] : memref<32x128xf32, #tpu.memory_space<vmem>> -> memref<1x128xf32, #tpu.memory_space<vmem>>
    %250 = tpu.memref_slice %arg6[%c22_i32_206] : memref<32x!tpu.dma_semaphore, #tpu.memory_space<semaphore_mem>> -> memref<1x!tpu.dma_semaphore, #tpu.memory_space<semaphore_mem>>
    %251 = tpu.memref_squeeze %250 : memref<1x!tpu.dma_semaphore, #tpu.memory_space<semaphore_mem>> -> memref<!tpu.dma_semaphore, #tpu.memory_space<semaphore_mem>>
    tpu.wait_dma2 semaphore(%251 : memref<!tpu.dma_semaphore, #tpu.memory_space<semaphore_mem>>) src(%248 : memref<1x128xf32, #tpu.memory_space<any>>) dst(%249 : memref<1x128xf32, #tpu.memory_space<vmem>>)
    %c23_i32_211 = arith.constant 23 : i32
    %c0_i32_212 = arith.constant 0 : i32
    %c0_i32_213 = arith.constant 0 : i32
    %252 = tpu.memref_slice %arg3[%c0_i32_212, %c0_i32_213] : memref<512x128xf32, #tpu.memory_space<any>> -> memref<1x128xf32, #tpu.memory_space<any>>
    %c23_i32_214 = arith.constant 23 : i32
    %c0_i32_215 = arith.constant 0 : i32
    %253 = tpu.memref_slice %arg5[%c23_i32_214, %c0_i32_215] : memref<32x128xf32, #tpu.memory_space<vmem>> -> memref<1x128xf32, #tpu.memory_space<vmem>>
    %254 = tpu.memref_slice %arg6[%c23_i32_211] : memref<32x!tpu.dma_semaphore, #tpu.memory_space<semaphore_mem>> -> memref<1x!tpu.dma_semaphore, #tpu.memory_space<semaphore_mem>>
    %255 = tpu.memref_squeeze %254 : memref<1x!tpu.dma_semaphore, #tpu.memory_space<semaphore_mem>> -> memref<!tpu.dma_semaphore, #tpu.memory_space<semaphore_mem>>
    tpu.wait_dma2 semaphore(%255 : memref<!tpu.dma_semaphore, #tpu.memory_space<semaphore_mem>>) src(%252 : memref<1x128xf32, #tpu.memory_space<any>>) dst(%253 : memref<1x128xf32, #tpu.memory_space<vmem>>)
    %c24_i32_216 = arith.constant 24 : i32
    %c0_i32_217 = arith.constant 0 : i32
    %c0_i32_218 = arith.constant 0 : i32
    %256 = tpu.memref_slice %arg3[%c0_i32_217, %c0_i32_218] : memref<512x128xf32, #tpu.memory_space<any>> -> memref<1x128xf32, #tpu.memory_space<any>>
    %c24_i32_219 = arith.constant 24 : i32
    %c0_i32_220 = arith.constant 0 : i32
    %257 = tpu.memref_slice %arg5[%c24_i32_219, %c0_i32_220] : memref<32x128xf32, #tpu.memory_space<vmem>> -> memref<1x128xf32, #tpu.memory_space<vmem>>
    %258 = tpu.memref_slice %arg6[%c24_i32_216] : memref<32x!tpu.dma_semaphore, #tpu.memory_space<semaphore_mem>> -> memref<1x!tpu.dma_semaphore, #tpu.memory_space<semaphore_mem>>
    %259 = tpu.memref_squeeze %258 : memref<1x!tpu.dma_semaphore, #tpu.memory_space<semaphore_mem>> -> memref<!tpu.dma_semaphore, #tpu.memory_space<semaphore_mem>>
    tpu.wait_dma2 semaphore(%259 : memref<!tpu.dma_semaphore, #tpu.memory_space<semaphore_mem>>) src(%256 : memref<1x128xf32, #tpu.memory_space<any>>) dst(%257 : memref<1x128xf32, #tpu.memory_space<vmem>>)
    %c25_i32_221 = arith.constant 25 : i32
    %c0_i32_222 = arith.constant 0 : i32
    %c0_i32_223 = arith.constant 0 : i32
    %260 = tpu.memref_slice %arg3[%c0_i32_222, %c0_i32_223] : memref<512x128xf32, #tpu.memory_space<any>> -> memref<1x128xf32, #tpu.memory_space<any>>
    %c25_i32_224 = arith.constant 25 : i32
    %c0_i32_225 = arith.constant 0 : i32
    %261 = tpu.memref_slice %arg5[%c25_i32_224, %c0_i32_225] : memref<32x128xf32, #tpu.memory_space<vmem>> -> memref<1x128xf32, #tpu.memory_space<vmem>>
    %262 = tpu.memref_slice %arg6[%c25_i32_221] : memref<32x!tpu.dma_semaphore, #tpu.memory_space<semaphore_mem>> -> memref<1x!tpu.dma_semaphore, #tpu.memory_space<semaphore_mem>>
    %263 = tpu.memref_squeeze %262 : memref<1x!tpu.dma_semaphore, #tpu.memory_space<semaphore_mem>> -> memref<!tpu.dma_semaphore, #tpu.memory_space<semaphore_mem>>
    tpu.wait_dma2 semaphore(%263 : memref<!tpu.dma_semaphore, #tpu.memory_space<semaphore_mem>>) src(%260 : memref<1x128xf32, #tpu.memory_space<any>>) dst(%261 : memref<1x128xf32, #tpu.memory_space<vmem>>)
    %c26_i32_226 = arith.constant 26 : i32
    %c0_i32_227 = arith.constant 0 : i32
    %c0_i32_228 = arith.constant 0 : i32
    %264 = tpu.memref_slice %arg3[%c0_i32_227, %c0_i32_228] : memref<512x128xf32, #tpu.memory_space<any>> -> memref<1x128xf32, #tpu.memory_space<any>>
    %c26_i32_229 = arith.constant 26 : i32
    %c0_i32_230 = arith.constant 0 : i32
    %265 = tpu.memref_slice %arg5[%c26_i32_229, %c0_i32_230] : memref<32x128xf32, #tpu.memory_space<vmem>> -> memref<1x128xf32, #tpu.memory_space<vmem>>
    %266 = tpu.memref_slice %arg6[%c26_i32_226] : memref<32x!tpu.dma_semaphore, #tpu.memory_space<semaphore_mem>> -> memref<1x!tpu.dma_semaphore, #tpu.memory_space<semaphore_mem>>
    %267 = tpu.memref_squeeze %266 : memref<1x!tpu.dma_semaphore, #tpu.memory_space<semaphore_mem>> -> memref<!tpu.dma_semaphore, #tpu.memory_space<semaphore_mem>>
    tpu.wait_dma2 semaphore(%267 : memref<!tpu.dma_semaphore, #tpu.memory_space<semaphore_mem>>) src(%264 : memref<1x128xf32, #tpu.memory_space<any>>) dst(%265 : memref<1x128xf32, #tpu.memory_space<vmem>>)
    %c27_i32_231 = arith.constant 27 : i32
    %c0_i32_232 = arith.constant 0 : i32
    %c0_i32_233 = arith.constant 0 : i32
    %268 = tpu.memref_slice %arg3[%c0_i32_232, %c0_i32_233] : memref<512x128xf32, #tpu.memory_space<any>> -> memref<1x128xf32, #tpu.memory_space<any>>
    %c27_i32_234 = arith.constant 27 : i32
    %c0_i32_235 = arith.constant 0 : i32
    %269 = tpu.memref_slice %arg5[%c27_i32_234, %c0_i32_235] : memref<32x128xf32, #tpu.memory_space<vmem>> -> memref<1x128xf32, #tpu.memory_space<vmem>>
    %270 = tpu.memref_slice %arg6[%c27_i32_231] : memref<32x!tpu.dma_semaphore, #tpu.memory_space<semaphore_mem>> -> memref<1x!tpu.dma_semaphore, #tpu.memory_space<semaphore_mem>>
    %271 = tpu.memref_squeeze %270 : memref<1x!tpu.dma_semaphore, #tpu.memory_space<semaphore_mem>> -> memref<!tpu.dma_semaphore, #tpu.memory_space<semaphore_mem>>
    tpu.wait_dma2 semaphore(%271 : memref<!tpu.dma_semaphore, #tpu.memory_space<semaphore_mem>>) src(%268 : memref<1x128xf32, #tpu.memory_space<any>>) dst(%269 : memref<1x128xf32, #tpu.memory_space<vmem>>)
    %c28_i32_236 = arith.constant 28 : i32
    %c0_i32_237 = arith.constant 0 : i32
    %c0_i32_238 = arith.constant 0 : i32
    %272 = tpu.memref_slice %arg3[%c0_i32_237, %c0_i32_238] : memref<512x128xf32, #tpu.memory_space<any>> -> memref<1x128xf32, #tpu.memory_space<any>>
    %c28_i32_239 = arith.constant 28 : i32
    %c0_i32_240 = arith.constant 0 : i32
    %273 = tpu.memref_slice %arg5[%c28_i32_239, %c0_i32_240] : memref<32x128xf32, #tpu.memory_space<vmem>> -> memref<1x128xf32, #tpu.memory_space<vmem>>
    %274 = tpu.memref_slice %arg6[%c28_i32_236] : memref<32x!tpu.dma_semaphore, #tpu.memory_space<semaphore_mem>> -> memref<1x!tpu.dma_semaphore, #tpu.memory_space<semaphore_mem>>
    %275 = tpu.memref_squeeze %274 : memref<1x!tpu.dma_semaphore, #tpu.memory_space<semaphore_mem>> -> memref<!tpu.dma_semaphore, #tpu.memory_space<semaphore_mem>>
    tpu.wait_dma2 semaphore(%275 : memref<!tpu.dma_semaphore, #tpu.memory_space<semaphore_mem>>) src(%272 : memref<1x128xf32, #tpu.memory_space<any>>) dst(%273 : memref<1x128xf32, #tpu.memory_space<vmem>>)
    %c29_i32_241 = arith.constant 29 : i32
    %c0_i32_242 = arith.constant 0 : i32
    %c0_i32_243 = arith.constant 0 : i32
    %276 = tpu.memref_slice %arg3[%c0_i32_242, %c0_i32_243] : memref<512x128xf32, #tpu.memory_space<any>> -> memref<1x128xf32, #tpu.memory_space<any>>
    %c29_i32_244 = arith.constant 29 : i32
    %c0_i32_245 = arith.constant 0 : i32
    %277 = tpu.memref_slice %arg5[%c29_i32_244, %c0_i32_245] : memref<32x128xf32, #tpu.memory_space<vmem>> -> memref<1x128xf32, #tpu.memory_space<vmem>>
    %278 = tpu.memref_slice %arg6[%c29_i32_241] : memref<32x!tpu.dma_semaphore, #tpu.memory_space<semaphore_mem>> -> memref<1x!tpu.dma_semaphore, #tpu.memory_space<semaphore_mem>>
    %279 = tpu.memref_squeeze %278 : memref<1x!tpu.dma_semaphore, #tpu.memory_space<semaphore_mem>> -> memref<!tpu.dma_semaphore, #tpu.memory_space<semaphore_mem>>
    tpu.wait_dma2 semaphore(%279 : memref<!tpu.dma_semaphore, #tpu.memory_space<semaphore_mem>>) src(%276 : memref<1x128xf32, #tpu.memory_space<any>>) dst(%277 : memref<1x128xf32, #tpu.memory_space<vmem>>)
    %c30_i32_246 = arith.constant 30 : i32
    %c0_i32_247 = arith.constant 0 : i32
    %c0_i32_248 = arith.constant 0 : i32
    %280 = tpu.memref_slice %arg3[%c0_i32_247, %c0_i32_248] : memref<512x128xf32, #tpu.memory_space<any>> -> memref<1x128xf32, #tpu.memory_space<any>>
    %c30_i32_249 = arith.constant 30 : i32
    %c0_i32_250 = arith.constant 0 : i32
    %281 = tpu.memref_slice %arg5[%c30_i32_249, %c0_i32_250] : memref<32x128xf32, #tpu.memory_space<vmem>> -> memref<1x128xf32, #tpu.memory_space<vmem>>
    %282 = tpu.memref_slice %arg6[%c30_i32_246] : memref<32x!tpu.dma_semaphore, #tpu.memory_space<semaphore_mem>> -> memref<1x!tpu.dma_semaphore, #tpu.memory_space<semaphore_mem>>
    %283 = tpu.memref_squeeze %282 : memref<1x!tpu.dma_semaphore, #tpu.memory_space<semaphore_mem>> -> memref<!tpu.dma_semaphore, #tpu.memory_space<semaphore_mem>>
    tpu.wait_dma2 semaphore(%283 : memref<!tpu.dma_semaphore, #tpu.memory_space<semaphore_mem>>) src(%280 : memref<1x128xf32, #tpu.memory_space<any>>) dst(%281 : memref<1x128xf32, #tpu.memory_space<vmem>>)
    %c31_i32_251 = arith.constant 31 : i32
    %c0_i32_252 = arith.constant 0 : i32
    %c0_i32_253 = arith.constant 0 : i32
    %284 = tpu.memref_slice %arg3[%c0_i32_252, %c0_i32_253] : memref<512x128xf32, #tpu.memory_space<any>> -> memref<1x128xf32, #tpu.memory_space<any>>
    %c31_i32_254 = arith.constant 31 : i32
    %c0_i32_255 = arith.constant 0 : i32
    %285 = tpu.memref_slice %arg5[%c31_i32_254, %c0_i32_255] : memref<32x128xf32, #tpu.memory_space<vmem>> -> memref<1x128xf32, #tpu.memory_space<vmem>>
    %286 = tpu.memref_slice %arg6[%c31_i32_251] : memref<32x!tpu.dma_semaphore, #tpu.memory_space<semaphore_mem>> -> memref<1x!tpu.dma_semaphore, #tpu.memory_space<semaphore_mem>>
    %287 = tpu.memref_squeeze %286 : memref<1x!tpu.dma_semaphore, #tpu.memory_space<semaphore_mem>> -> memref<!tpu.dma_semaphore, #tpu.memory_space<semaphore_mem>>
    tpu.wait_dma2 semaphore(%287 : memref<!tpu.dma_semaphore, #tpu.memory_space<semaphore_mem>>) src(%284 : memref<1x128xf32, #tpu.memory_space<any>>) dst(%285 : memref<1x128xf32, #tpu.memory_space<vmem>>)
    %c0_256 = arith.constant 0 : index
    %c0_257 = arith.constant 0 : index
    %288 = vector.load %arg2[%c0_256, %c0_257] : memref<16x128xf32, #tpu.memory_space<vmem>>, vector<16x128xf32>
    %289 = tpu.concatenate %288, %288 in 0 : vector<16x128xf32>, vector<16x128xf32> -> vector<32x128xf32>
    %c0_258 = arith.constant 0 : index
    %c0_259 = arith.constant 0 : index
    %290 = vector.load %arg5[%c0_258, %c0_259] : memref<32x128xf32, #tpu.memory_space<vmem>>, vector<32x128xf32>
    %291 = arith.addf %290, %289 : vector<32x128xf32>
    %c0_260 = arith.constant 0 : index
    %c0_261 = arith.constant 0 : index
    %292 = vector.load %arg4[%c0_260, %c0_261] : memref<32x128xf32, #tpu.memory_space<vmem>>, vector<32x128xf32>
    tpu.vector_store %arg4[%c0_260, %c0_261], %291 {strides = array<i32>} : memref<32x128xf32, #tpu.memory_space<vmem>>, vector<32x128xf32>,
    return
  }
  func.func @transform_0(%arg0: i32, %arg1: memref<32xi32, #tpu.memory_space<smem>>) -> (i32, i32) {
    %c0_i32 = arith.constant 0 : i32
    %c0_i32_0 = arith.constant 0 : i32
    %c0_i32_1 = arith.constant 0 : i32
    return %c0_i32, %c0_i32_0 : i32, i32
  }
  func.func @transform_2(%arg0: i32, %arg1: memref<32xi32, #tpu.memory_space<smem>>) -> (i32, i32) {
    %c0_i32 = arith.constant 0 : i32
    %c0_i32_0 = arith.constant 0 : i32
    %c0_i32_1 = arith.constant 0 : i32
    return %c0_i32, %c0_i32_0 : i32, i32
  }
}

</mosaic_0001>

<llo_original>
// kernel: clip_embeddings.1
$region0: #{clip_embeddings.1}
  #allocation0 [shape = 'u32[]', space=smem, size = 0x4, offset = 0x4, fixed_abs, tag = 'smem constant byte address 0x4 - core index']
  #allocation1 [shape = 'u32[144,128]{1,0:T(1,128)}', space=vmem, size = 0x12000, scoped, tag = 'internal scratch']
  #allocation2 [shape = 'f32[32,128]{1,0:T(8,128)}', space=vmem, size = 0x4000, scoped, tag = 'scratch operand']
  #allocation3 [shape = 's32[32]{0}', space=sflag, size = 0x80, scoped, tag = 'scratch operand']
  #allocation4 [shape = 's32[1]{0}', space=sflag, size = 0x4, scoped, tag = 'scoped memory for clip_embeddings.1']
  #allocation5 [shape = 'u8[512]{0}', space=smem, size = 0x200, scoped, tag = 'prefetched SMEM operand 0']
  #allocation8 [shape = 's32[]', space=sflag, size = 0x4, offset = 0, fixed_abs, tag = 'sflag constant byte address 0x0 - dummy sync flag']
  #allocation9 [shape = 's32[]', space=sflag, size = 0x4, offset = 0, fixed_abs, tag = 'sflag constant byte address 0x0 - dummy sync flag']
  #allocation10 [shape = 'u32[]', space=smem, size = 0x4, offset = 0x44, fixed_abs, tag = 'smem constant byte address 0x44 - assertion arg 0']
  #allocation11 [shape = 'u32[]', space=smem, size = 0x4, offset = 0x48, fixed_abs, tag = 'smem constant byte address 0x48 - assertion arg 1']
  #allocation12 [shape = 's32[]', space=sflag, size = 0x4, offset = 0, fixed_abs, tag = 'sflag constant byte address 0x0 - dummy sync flag']
  #allocation13 [shape = 's32[]', space=sflag, size = 0x4, offset = 0, fixed_abs, tag = 'sflag constant byte address 0x0 - dummy sync flag']
  #allocation14 [shape = 's32[]', space=sflag, size = 0x4, offset = 0, fixed_abs, tag = 'sflag constant byte address 0x0 - dummy sync flag']
  #allocation15 [shape = 's32[]', space=sflag, size = 0x4, offset = 0, fixed_abs, tag = 'sflag constant byte address 0x0 - dummy sync flag']
  #allocation16 [shape = 's32[]', space=sflag, size = 0x4, offset = 0, fixed_abs, tag = 'sflag constant byte address 0x0 - dummy sync flag']
  #allocation17 [shape = 's32[]', space=sflag, size = 0x4, offset = 0, fixed_abs, tag = 'sflag constant byte address 0x0 - dummy sync flag']
  #allocation18 [shape = 's32[]', space=sflag, size = 0x4, offset = 0, fixed_abs, tag = 'sflag constant byte address 0x0 - dummy sync flag']
  #allocation19 [shape = 's32[]', space=sflag, size = 0x4, offset = 0, fixed_abs, tag = 'sflag constant byte address 0x0 - dummy sync flag']
  #allocation20 [shape = 's32[]', space=sflag, size = 0x4, offset = 0, fixed_abs, tag = 'sflag constant byte address 0x0 - dummy sync flag']
  #allocation21 [shape = 's32[]', space=sflag, size = 0x4, offset = 0, fixed_abs, tag = 'sflag constant byte address 0x0 - dummy sync flag']
  #allocation22 [shape = 's32[]', space=sflag, size = 0x4, offset = 0, fixed_abs, tag = 'sflag constant byte address 0x0 - dummy sync flag']
  #allocation23 [shape = 's32[]', space=sflag, size = 0x4, offset = 0, fixed_abs, tag = 'sflag constant byte address 0x0 - dummy sync flag']
  #allocation24 [shape = 's32[]', space=sflag, size = 0x4, offset = 0, fixed_abs, tag = 'sflag constant byte address 0x0 - dummy sync flag']
  #allocation25 [shape = 's32[]', space=sflag, size = 0x4, offset = 0, fixed_abs, tag = 'sflag constant byte address 0x0 - dummy sync flag']
  #allocation26 [shape = 's32[]', space=sflag, size = 0x4, offset = 0, fixed_abs, tag = 'sflag constant byte address 0x0 - dummy sync flag']
  #allocation27 [shape = 's32[]', space=sflag, size = 0x4, offset = 0, fixed_abs, tag = 'sflag constant byte address 0x0 - dummy sync flag']
  #allocation28 [shape = 's32[]', space=sflag, size = 0x4, offset = 0, fixed_abs, tag = 'sflag constant byte address 0x0 - dummy sync flag']
  #allocation29 [shape = 's32[]', space=sflag, size = 0x4, offset = 0, fixed_abs, tag = 'sflag constant byte address 0x0 - dummy sync flag']
  #allocation30 [shape = 's32[]', space=sflag, size = 0x4, offset = 0, fixed_abs, tag = 'sflag constant byte address 0x0 - dummy sync flag']
  #allocation31 [shape = 's32[]', space=sflag, size = 0x4, offset = 0, fixed_abs, tag = 'sflag constant byte address 0x0 - dummy sync flag']
  #allocation32 [shape = 's32[]', space=sflag, size = 0x4, offset = 0, fixed_abs, tag = 'sflag constant byte address 0x0 - dummy sync flag']
  #allocation33 [shape = 's32[]', space=sflag, size = 0x4, offset = 0, fixed_abs, tag = 'sflag constant byte address 0x0 - dummy sync flag']
  #allocation34 [shape = 's32[]', space=sflag, size = 0x4, offset = 0, fixed_abs, tag = 'sflag constant byte address 0x0 - dummy sync flag']
  #allocation35 [shape = 's32[]', space=sflag, size = 0x4, offset = 0, fixed_abs, tag = 'sflag constant byte address 0x0 - dummy sync flag']
  #allocation36 [shape = 's32[]', space=sflag, size = 0x4, offset = 0, fixed_abs, tag = 'sflag constant byte address 0x0 - dummy sync flag']
  #allocation37 [shape = 's32[]', space=sflag, size = 0x4, offset = 0, fixed_abs, tag = 'sflag constant byte address 0x0 - dummy sync flag']
  #allocation38 [shape = 's32[]', space=sflag, size = 0x4, offset = 0, fixed_abs, tag = 'sflag constant byte address 0x0 - dummy sync flag']
  #allocation39 [shape = 's32[]', space=sflag, size = 0x4, offset = 0, fixed_abs, tag = 'sflag constant byte address 0x0 - dummy sync flag']
  #allocation40 [shape = 's32[]', space=sflag, size = 0x4, offset = 0, fixed_abs, tag = 'sflag constant byte address 0x0 - dummy sync flag']
  #allocation41 [shape = 's32[]', space=sflag, size = 0x4, offset = 0, fixed_abs, tag = 'sflag constant byte address 0x0 - dummy sync flag']
  #allocation42 [shape = 's32[]', space=sflag, size = 0x4, offset = 0, fixed_abs, tag = 'sflag constant byte address 0x0 - dummy sync flag']
  #allocation43 [shape = 's32[]', space=sflag, size = 0x4, offset = 0, fixed_abs, tag = 'sflag constant byte address 0x0 - dummy sync flag']
  #allocation44 [shape = 's32[]', space=sflag, size = 0x4, offset = 0, fixed_abs, tag = 'sflag constant byte address 0x0 - dummy sync flag']
  #allocation45 [shape = 's32[]', space=sflag, size = 0x4, offset = 0, fixed_abs, tag = 'sflag constant byte address 0x0 - dummy sync flag']
  #allocation46 [shape = 's32[]', space=sflag, size = 0x4, offset = 0, fixed_abs, tag = 'sflag constant byte address 0x0 - dummy sync flag']
  #allocation47 [shape = 's32[]', space=sflag, size = 0x4, offset = 0, fixed_abs, tag = 'sflag constant byte address 0x0 - dummy sync flag']
  #allocation48 [shape = 's32[]', space=sflag, size = 0x4, offset = 0, fixed_abs, tag = 'sflag constant byte address 0x0 - dummy sync flag']
  #allocation49 [shape = 's32[]', space=sflag, size = 0x4, offset = 0, fixed_abs, tag = 'sflag constant byte address 0x0 - dummy sync flag']
  #allocation50 [shape = 's32[]', space=sflag, size = 0x4, offset = 0, fixed_abs, tag = 'sflag constant byte address 0x0 - dummy sync flag']
  #allocation51 [shape = 's32[]', space=sflag, size = 0x4, offset = 0, fixed_abs, tag = 'sflag constant byte address 0x0 - dummy sync flag']
  #allocation52 [shape = 's32[]', space=sflag, size = 0x4, offset = 0, fixed_abs, tag = 'sflag constant byte address 0x0 - dummy sync flag']
  #allocation53 [shape = 's32[]', space=sflag, size = 0x4, offset = 0, fixed_abs, tag = 'sflag constant byte address 0x0 - dummy sync flag']
  #allocation54 [shape = 's32[]', space=sflag, size = 0x4, offset = 0, fixed_abs, tag = 'sflag constant byte address 0x0 - dummy sync flag']
  #allocation55 [shape = 's32[]', space=sflag, size = 0x4, offset = 0, fixed_abs, tag = 'sflag constant byte address 0x0 - dummy sync flag']
  #allocation56 [shape = 's32[]', space=sflag, size = 0x4, offset = 0, fixed_abs, tag = 'sflag constant byte address 0x0 - dummy sync flag']
  #allocation57 [shape = 's32[]', space=sflag, size = 0x4, offset = 0, fixed_abs, tag = 'sflag constant byte address 0x0 - dummy sync flag']
  #allocation58 [shape = 's32[]', space=sflag, size = 0x4, offset = 0, fixed_abs, tag = 'sflag constant byte address 0x0 - dummy sync flag']
  #allocation59 [shape = 's32[]', space=sflag, size = 0x4, offset = 0, fixed_abs, tag = 'sflag constant byte address 0x0 - dummy sync flag']
  #allocation60 [shape = 's32[]', space=sflag, size = 0x4, offset = 0, fixed_abs, tag = 'sflag constant byte address 0x0 - dummy sync flag']
  #allocation61 [shape = 's32[]', space=sflag, size = 0x4, offset = 0, fixed_abs, tag = 'sflag constant byte address 0x0 - dummy sync flag']
  #allocation62 [shape = 's32[]', space=sflag, size = 0x4, offset = 0, fixed_abs, tag = 'sflag constant byte address 0x0 - dummy sync flag']
  #allocation63 [shape = 's32[]', space=sflag, size = 0x4, offset = 0, fixed_abs, tag = 'sflag constant byte address 0x0 - dummy sync flag']
  #allocation64 [shape = 's32[]', space=sflag, size = 0x4, offset = 0, fixed_abs, tag = 'sflag constant byte address 0x0 - dummy sync flag']
  #allocation65 [shape = 's32[]', space=sflag, size = 0x4, offset = 0, fixed_abs, tag = 'sflag constant byte address 0x0 - dummy sync flag']
  #allocation66 [shape = 's32[]', space=sflag, size = 0x4, offset = 0, fixed_abs, tag = 'sflag constant byte address 0x0 - dummy sync flag']
  #allocation67 [shape = 's32[]', space=sflag, size = 0x4, offset = 0, fixed_abs, tag = 'sflag constant byte address 0x0 - dummy sync flag']
  #allocation68 [shape = 's32[]', space=sflag, size = 0x4, offset = 0, fixed_abs, tag = 'sflag constant byte address 0x0 - dummy sync flag']
  #allocation69 [shape = 's32[]', space=sflag, size = 0x4, offset = 0, fixed_abs, tag = 'sflag constant byte address 0x0 - dummy sync flag']
  #allocation70 [shape = 's32[]', space=sflag, size = 0x4, offset = 0, fixed_abs, tag = 'sflag constant byte address 0x0 - dummy sync flag']
  #allocation71 [shape = 's32[]', space=sflag, size = 0x4, offset = 0, fixed_abs, tag = 'sflag constant byte address 0x0 - dummy sync flag']
  #allocation72 [shape = 's32[]', space=sflag, size = 0x4, offset = 0, fixed_abs, tag = 'sflag constant byte address 0x0 - dummy sync flag']
  #allocation73 [shape = 's32[]', space=sflag, size = 0x4, offset = 0, fixed_abs, tag = 'sflag constant byte address 0x0 - dummy sync flag']
  %s0 = inlined_call_operand.vmem [shape: s32[32], index: 0, kind: input, shape index: {}]
  %s1 = inlined_call_operand.vmem [shape: f32[16,128], index: 1, kind: input, shape index: {}]
  %s2 = inlined_call_operand.hbm [shape: f32[512,128], index: 2, kind: input, shape index: {}]
  %s3 = inlined_call_operand.hbm [shape: f32[32,128], index: 3, kind: output, shape index: {}]
  %s4 = sld [smem:[#allocation0]]
  $region142: #{clip_embeddings.1} parent=0
    _
  %s6 = ssub.s32 1, %s4
  %s7 = scalar_select 0, %s6, %s4
  %s8 = sshll.u32 %s0, 4
  %s9 = int_to_ptr.vmem [resolvable:$true] %s8
  %11 = dma.vmem_to_smem %s9, 16, [#allocation5], [#allocation4]
  %12 = dma.done [#allocation4], 16
  %13 = sfence
  $region1: #{clip_embeddings.1} parent=0
    #allocation6 [shape = 'u8[16384]{0}', space=vmem, size = 0x4000, scoped, tag = 'output window, operand 0, single buffered']
    #allocation7 [shape = 's32[1]{0}', space=sflag, size = 0x4, scoped, tag = 'scoped memory for clip_embeddings.1']
    %14 = vsyncpa [#allocation7], 0
    // Predicated region
    $region2: #{clip_embeddings.1} parent=1 // pred_check
      _
    $region3: #{clip_embeddings.1} parent=1 // pred_check_branch
      %16 = sbr.rel (0) target = $region5
    $region4: #{clip_embeddings.1} parent=1 // pred_region
      _
    $region5: #{clip_embeddings.1} parent=1 // pred_fallthru
      _
    %s17 = sld [smem:[#allocation5]]
    %s18 = smul.addr %s17, 16
    %s19 = scalar_lea.hbm %s2, %s18
    // Predicated region
    $region6: #{clip_embeddings.1} parent=1 // pred_check
      _
    $region7: #{clip_embeddings.1} parent=1 // pred_check_branch
      %21 = sbr.rel target = $region9
    $region8: #{clip_embeddings.1} parent=1 // pred_region
      %22 = sst [smem:[#allocation10]] [#allocation9]
      %23 = sst [smem:[#allocation11]] [#allocation8]
    $region9: #{clip_embeddings.1} parent=1 // pred_fallthru
      _
    %25 = shalt.err (0)
    %s27 = sshll.u32 [#allocation2], 4
    %s28 = int_to_ptr.vmem [resolvable:$true] %s27
    %30 = dma.hbm_to_vmem [thread:$0]  %s19, 16, %s28, [#allocation3]
    %s31 = sld [smem:[#allocation5 + $0x1]]
    %s32 = smul.addr %s31, 16
    %s33 = scalar_lea.hbm %s2, %s32
    %s34 = scalar_lea.vmem [#allocation2], 1
    %s35 = scalar_lea.sflag [#allocation3], 1
    // Predicated region
    $region10: #{clip_embeddings.1} parent=1 // pred_check
      _
    $region11: #{clip_embeddings.1} parent=1 // pred_check_branch
      %37 = sbr.rel target = $region13
    $region12: #{clip_embeddings.1} parent=1 // pred_region
      %38 = sst [smem:[#allocation10]] [#allocation13]
      %39 = sst [smem:[#allocation11]] [#allocation12]
    $region13: #{clip_embeddings.1} parent=1 // pred_fallthru
      _
    %41 = shalt.err (0)
    %s43 = sshll.u32 %s34, 4
    %s44 = int_to_ptr.vmem [resolvable:$true] %s43
    %46 = dma.hbm_to_vmem [thread:$0]  %s33, 16, %s44, %s35
    %s47 = sld [smem:[#allocation5 + $0x2]]
    %s48 = smul.addr %s47, 16
    %s49 = scalar_lea.hbm %s2, %s48
    %s50 = scalar_lea.vmem [#allocation2], 2
    %s51 = scalar_lea.sflag [#allocation3], 2
    // Predicated region
    $region14: #{clip_embeddings.1} parent=1 // pred_check
      _
    $region15: #{clip_embeddings.1} parent=1 // pred_check_branch
      %53 = sbr.rel target = $region17
    $region16: #{clip_embeddings.1} parent=1 // pred_region
      %54 = sst [smem:[#allocation10]] [#allocation15]
      %55 = sst [smem:[#allocation11]] [#allocation14]
    $region17: #{clip_embeddings.1} parent=1 // pred_fallthru
      _
    %57 = shalt.err (0)
    %s59 = sshll.u32 %s50, 4
    %s60 = int_to_ptr.vmem [resolvable:$true] %s59
    %62 = dma.hbm_to_vmem [thread:$0]  %s49, 16, %s60, %s51
    %s63 = sld [smem:[#allocation5 + $0x3]]
    %s64 = smul.addr %s63, 16
    %s65 = scalar_lea.hbm %s2, %s64
    %s66 = scalar_lea.vmem [#allocation2], 3
    %s67 = scalar_lea.sflag [#allocation3], 3
    // Predicated region
    $region18: #{clip_embeddings.1} parent=1 // pred_check
      _
    $region19: #{clip_embeddings.1} parent=1 // pred_check_branch
      %69 = sbr.rel target = $region21
    $region20: #{clip_embeddings.1} parent=1 // pred_region
      %70 = sst [smem:[#allocation10]] [#allocation17]
      %71 = sst [smem:[#allocation11]] [#allocation16]
    $region21: #{clip_embeddings.1} parent=1 // pred_fallthru
      _
    %73 = shalt.err (0)
    %s75 = sshll.u32 %s66, 4
    %s76 = int_to_ptr.vmem [resolvable:$true] %s75
    %78 = dma.hbm_to_vmem [thread:$0]  %s65, 16, %s76, %s67
    %s79 = sld [smem:[#allocation5 + $0x4]]
    %s80 = smul.addr %s79, 16
    %s81 = scalar_lea.hbm %s2, %s80
    %s82 = scalar_lea.vmem [#allocation2], 4
    %s83 = scalar_lea.sflag [#allocation3], 4
    // Predicated region
    $region22: #{clip_embeddings.1} parent=1 // pred_check
      _
    $region23: #{clip_embeddings.1} parent=1 // pred_check_branch
      %85 = sbr.rel target = $region25
    $region24: #{clip_embeddings.1} parent=1 // pred_region
      %86 = sst [smem:[#allocation10]] [#allocation19]
      %87 = sst [smem:[#allocation11]] [#allocation18]
    $region25: #{clip_embeddings.1} parent=1 // pred_fallthru
      _
    %89 = shalt.err (0)
    %s91 = sshll.u32 %s82, 4
    %s92 = int_to_ptr.vmem [resolvable:$true] %s91
    %94 = dma.hbm_to_vmem [thread:$0]  %s81, 16, %s92, %s83
    %s95 = sld [smem:[#allocation5 + $0x5]]
    %s96 = smul.addr %s95, 16
    %s97 = scalar_lea.hbm %s2, %s96
    %s98 = scalar_lea.vmem [#allocation2], 5
    %s99 = scalar_lea.sflag [#allocation3], 5
    // Predicated region
    $region26: #{clip_embeddings.1} parent=1 // pred_check
      _
    $region27: #{clip_embeddings.1} parent=1 // pred_check_branch
      %101 = sbr.rel target = $region29
    $region28: #{clip_embeddings.1} parent=1 // pred_region
      %102 = sst [smem:[#allocation10]] [#allocation21]
      %103 = sst [smem:[#allocation11]] [#allocation20]
    $region29: #{clip_embeddings.1} parent=1 // pred_fallthru
      _
    %105 = shalt.err (0)
    %s107 = sshll.u32 %s98, 4
    %s108 = int_to_ptr.vmem [resolvable:$true] %s107
    %110 = dma.hbm_to_vmem [thread:$0]  %s97, 16, %s108, %s99
    %s111 = sld [smem:[#allocation5 + $0x6]]
    %s112 = smul.addr %s111, 16
    %s113 = scalar_lea.hbm %s2, %s112
    %s114 = scalar_lea.vmem [#allocation2], 6
    %s115 = scalar_lea.sflag [#allocation3], 6
    // Predicated region
    $region30: #{clip_embeddings.1} parent=1 // pred_check
      _
    $region31: #{clip_embeddings.1} parent=1 // pred_check_branch
      %117 = sbr.rel target = $region33
    $region32: #{clip_embeddings.1} parent=1 // pred_region
      %118 = sst [smem:[#allocation10]] [#allocation23]
      %119 = sst [smem:[#allocation11]] [#allocation22]
    $region33: #{clip_embeddings.1} parent=1 // pred_fallthru
      _
    %121 = shalt.err (0)
    %s123 = sshll.u32 %s114, 4
    %s124 = int_to_ptr.vmem [resolvable:$true] %s123
    %126 = dma.hbm_to_vmem [thread:$0]  %s113, 16, %s124, %s115
    %s127 = sld [smem:[#allocation5 + $0x7]]
    %s128 = smul.addr %s127, 16
    %s129 = scalar_lea.hbm %s2, %s128
    %s130 = scalar_lea.vmem [#allocation2], 7
    %s131 = scalar_lea.sflag [#allocation3], 7
    // Predicated region
    $region34: #{clip_embeddings.1} parent=1 // pred_check
      _
    $region35: #{clip_embeddings.1} parent=1 // pred_check_branch
      %133 = sbr.rel target = $region37
    $region36: #{clip_embeddings.1} parent=1 // pred_region
      %134 = sst [smem:[#allocation10]] [#allocation25]
      %135 = sst [smem:[#allocation11]] [#allocation24]
    $region37: #{clip_embeddings.1} parent=1 // pred_fallthru
      _
    %137 = shalt.err (0)
    %s139 = sshll.u32 %s130, 4
    %s140 = int_to_ptr.vmem [resolvable:$true] %s139
    %142 = dma.hbm_to_vmem [thread:$0]  %s129, 16, %s140, %s131
    %s143 = sld [smem:[#allocation5 + $0x8]]
    %s144 = smul.addr %s143, 16
    %s145 = scalar_lea.hbm %s2, %s144
    %s146 = scalar_lea.vmem [#allocation2], 8
    %s147 = scalar_lea.sflag [#allocation3], 8
    // Predicated region
    $region38: #{clip_embeddings.1} parent=1 // pred_check
      _
    $region39: #{clip_embeddings.1} parent=1 // pred_check_branch
      %149 = sbr.rel target = $region41
    $region40: #{clip_embeddings.1} parent=1 // pred_region
      %150 = sst [smem:[#allocation10]] [#allocation27]
      %151 = sst [smem:[#allocation11]] [#allocation26]
    $region41: #{clip_embeddings.1} parent=1 // pred_fallthru
      _
    %153 = shalt.err (0)
    %s155 = sshll.u32 %s146, 4
    %s156 = int_to_ptr.vmem [resolvable:$true] %s155
    %158 = dma.hbm_to_vmem [thread:$0]  %s145, 16, %s156, %s147
    %s159 = sld [smem:[#allocation5 + $0x9]]
    %s160 = smul.addr %s159, 16
    %s161 = scalar_lea.hbm %s2, %s160
    %s162 = scalar_lea.vmem [#allocation2], 9
    %s163 = scalar_lea.sflag [#allocation3], 9
    // Predicated region
    $region42: #{clip_embeddings.1} parent=1 // pred_check
      _
    $region43: #{clip_embeddings.1} parent=1 // pred_check_branch
      %165 = sbr.rel target = $region45
    $region44: #{clip_embeddings.1} parent=1 // pred_region
      %166 = sst [smem:[#allocation10]] [#allocation29]
      %167 = sst [smem:[#allocation11]] [#allocation28]
    $region45: #{clip_embeddings.1} parent=1 // pred_fallthru
      _
    %169 = shalt.err (0)
    %s171 = sshll.u32 %s162, 4
    %s172 = int_to_ptr.vmem [resolvable:$true] %s171
    %174 = dma.hbm_to_vmem [thread:$0]  %s161, 16, %s172, %s163
    %s175 = sld [smem:[#allocation5 + $0xa]]
    %s176 = smul.addr %s175, 16
    %s177 = scalar_lea.hbm %s2, %s176
    %s178 = scalar_lea.vmem [#allocation2], 10
    %s179 = scalar_lea.sflag [#allocation3], 10
    // Predicated region
    $region46: #{clip_embeddings.1} parent=1 // pred_check
      _
    $region47: #{clip_embeddings.1} parent=1 // pred_check_branch
      %181 = sbr.rel target = $region49
    $region48: #{clip_embeddings.1} parent=1 // pred_region
      %182 = sst [smem:[#allocation10]] [#allocation31]
      %183 = sst [smem:[#allocation11]] [#allocation30]
    $region49: #{clip_embeddings.1} parent=1 // pred_fallthru
      _
    %185 = shalt.err (0)
    %s187 = sshll.u32 %s178, 4
    %s188 = int_to_ptr.vmem [resolvable:$true] %s187
    %190 = dma.hbm_to_vmem [thread:$0]  %s177, 16, %s188, %s179
    %s191 = sld [smem:[#allocation5 + $0xb]]
    %s192 = smul.addr %s191, 16
    %s193 = scalar_lea.hbm %s2, %s192
    %s194 = scalar_lea.vmem [#allocation2], 11
    %s195 = scalar_lea.sflag [#allocation3], 11
    // Predicated region
    $region50: #{clip_embeddings.1} parent=1 // pred_check
      _
    $region51: #{clip_embeddings.1} parent=1 // pred_check_branch
      %197 = sbr.rel target = $region53
    $region52: #{clip_embeddings.1} parent=1 // pred_region
      %198 = sst [smem:[#allocation10]] [#allocation33]
      %199 = sst [smem:[#allocation11]] [#allocation32]
    $region53: #{clip_embeddings.1} parent=1 // pred_fallthru
      _
    %201 = shalt.err (0)
    %s203 = sshll.u32 %s194, 4
    %s204 = int_to_ptr.vmem [resolvable:$true] %s203
    %206 = dma.hbm_to_vmem [thread:$0]  %s193, 16, %s204, %s195
    %s207 = sld [smem:[#allocation5 + $0xc]]
    %s208 = smul.addr %s207, 16
    %s209 = scalar_lea.hbm %s2, %s208
    %s210 = scalar_lea.vmem [#allocation2], 12
    %s211 = scalar_lea.sflag [#allocation3], 12
    // Predicated region
    $region54: #{clip_embeddings.1} parent=1 // pred_check
      _
    $region55: #{clip_embeddings.1} parent=1 // pred_check_branch
      %213 = sbr.rel target = $region57
    $region56: #{clip_embeddings.1} parent=1 // pred_region
      %214 = sst [smem:[#allocation10]] [#allocation35]
      %215 = sst [smem:[#allocation11]] [#allocation34]
    $region57: #{clip_embeddings.1} parent=1 // pred_fallthru
      _
    %217 = shalt.err (0)
    %s219 = sshll.u32 %s210, 4
    %s220 = int_to_ptr.vmem [resolvable:$true] %s219
    %222 = dma.hbm_to_vmem [thread:$0]  %s209, 16, %s220, %s211
    %s223 = sld [smem:[#allocation5 + $0xd]]
    %s224 = smul.addr %s223, 16
    %s225 = scalar_lea.hbm %s2, %s224
    %s226 = scalar_lea.vmem [#allocation2], 13
    %s227 = scalar_lea.sflag [#allocation3], 13
    // Predicated region
    $region58: #{clip_embeddings.1} parent=1 // pred_check
      _
    $region59: #{clip_embeddings.1} parent=1 // pred_check_branch
      %229 = sbr.rel target = $region61
    $region60: #{clip_embeddings.1} parent=1 // pred_region
      %230 = sst [smem:[#allocation10]] [#allocation37]
      %231 = sst [smem:[#allocation11]] [#allocation36]
    $region61: #{clip_embeddings.1} parent=1 // pred_fallthru
      _
    %233 = shalt.err (0)
    %s235 = sshll.u32 %s226, 4
    %s236 = int_to_ptr.vmem [resolvable:$true] %s235
    %238 = dma.hbm_to_vmem [thread:$0]  %s225, 16, %s236, %s227
    %s239 = sld [smem:[#allocation5 + $0xe]]
    %s240 = smul.addr %s239, 16
    %s241 = scalar_lea.hbm %s2, %s240
    %s242 = scalar_lea.vmem [#allocation2], 14
    %s243 = scalar_lea.sflag [#allocation3], 14
    // Predicated region
    $region62: #{clip_embeddings.1} parent=1 // pred_check
      _
    $region63: #{clip_embeddings.1} parent=1 // pred_check_branch
      %245 = sbr.rel target = $region65
    $region64: #{clip_embeddings.1} parent=1 // pred_region
      %246 = sst [smem:[#allocation10]] [#allocation39]
      %247 = sst [smem:[#allocation11]] [#allocation38]
    $region65: #{clip_embeddings.1} parent=1 // pred_fallthru
      _
    %249 = shalt.err (0)
    %s251 = sshll.u32 %s242, 4
    %s252 = int_to_ptr.vmem [resolvable:$true] %s251
    %254 = dma.hbm_to_vmem [thread:$0]  %s241, 16, %s252, %s243
    %s255 = sld [smem:[#allocation5 + $0xf]]
    %s256 = smul.addr %s255, 16
    %s257 = scalar_lea.hbm %s2, %s256
    %s258 = scalar_lea.vmem [#allocation2], 15
    %s259 = scalar_lea.sflag [#allocation3], 15
    // Predicated region
    $region66: #{clip_embeddings.1} parent=1 // pred_check
      _
    $region67: #{clip_embeddings.1} parent=1 // pred_check_branch
      %261 = sbr.rel target = $region69
    $region68: #{clip_embeddings.1} parent=1 // pred_region
      %262 = sst [smem:[#allocation10]] [#allocation41]
      %263 = sst [smem:[#allocation11]] [#allocation40]
    $region69: #{clip_embeddings.1} parent=1 // pred_fallthru
      _
    %265 = shalt.err (0)
    %s267 = sshll.u32 %s258, 4
    %s268 = int_to_ptr.vmem [resolvable:$true] %s267
    %270 = dma.hbm_to_vmem [thread:$0]  %s257, 16, %s268, %s259
    %s271 = sld [smem:[#allocation5 + $0x10]]
    %s272 = smul.addr %s271, 16
    %s273 = scalar_lea.hbm %s2, %s272
    %s274 = scalar_lea.vmem [#allocation2], 16
    %s275 = scalar_lea.sflag [#allocation3], 16
    // Predicated region
    $region70: #{clip_embeddings.1} parent=1 // pred_check
      _
    $region71: #{clip_embeddings.1} parent=1 // pred_check_branch
      %277 = sbr.rel target = $region73
    $region72: #{clip_embeddings.1} parent=1 // pred_region
      %278 = sst [smem:[#allocation10]] [#allocation43]
      %279 = sst [smem:[#allocation11]] [#allocation42]
    $region73: #{clip_embeddings.1} parent=1 // pred_fallthru
      _
    %281 = shalt.err (0)
    %s283 = sshll.u32 %s274, 4
    %s284 = int_to_ptr.vmem [resolvable:$true] %s283
    %286 = dma.hbm_to_vmem [thread:$0]  %s273, 16, %s284, %s275
    %s287 = sld [smem:[#allocation5 + $0x11]]
    %s288 = smul.addr %s287, 16
    %s289 = scalar_lea.hbm %s2, %s288
    %s290 = scalar_lea.vmem [#allocation2], 17
    %s291 = scalar_lea.sflag [#allocation3], 17
    // Predicated region
    $region74: #{clip_embeddings.1} parent=1 // pred_check
      _
    $region75: #{clip_embeddings.1} parent=1 // pred_check_branch
      %293 = sbr.rel target = $region77
    $region76: #{clip_embeddings.1} parent=1 // pred_region
      %294 = sst [smem:[#allocation10]] [#allocation45]
      %295 = sst [smem:[#allocation11]] [#allocation44]
    $region77: #{clip_embeddings.1} parent=1 // pred_fallthru
      _
    %297 = shalt.err (0)
    %s299 = sshll.u32 %s290, 4
    %s300 = int_to_ptr.vmem [resolvable:$true] %s299
    %302 = dma.hbm_to_vmem [thread:$0]  %s289, 16, %s300, %s291
    %s303 = sld [smem:[#allocation5 + $0x12]]
    %s304 = smul.addr %s303, 16
    %s305 = scalar_lea.hbm %s2, %s304
    %s306 = scalar_lea.vmem [#allocation2], 18
    %s307 = scalar_lea.sflag [#allocation3], 18
    // Predicated region
    $region78: #{clip_embeddings.1} parent=1 // pred_check
      _
    $region79: #{clip_embeddings.1} parent=1 // pred_check_branch
      %309 = sbr.rel target = $region81
    $region80: #{clip_embeddings.1} parent=1 // pred_region
      %310 = sst [smem:[#allocation10]] [#allocation47]
      %311 = sst [smem:[#allocation11]] [#allocation46]
    $region81: #{clip_embeddings.1} parent=1 // pred_fallthru
      _
    %313 = shalt.err (0)
    %s315 = sshll.u32 %s306, 4
    %s316 = int_to_ptr.vmem [resolvable:$true] %s315
    %318 = dma.hbm_to_vmem [thread:$0]  %s305, 16, %s316, %s307
    %s319 = sld [smem:[#allocation5 + $0x13]]
    %s320 = smul.addr %s319, 16
    %s321 = scalar_lea.hbm %s2, %s320
    %s322 = scalar_lea.vmem [#allocation2], 19
    %s323 = scalar_lea.sflag [#allocation3], 19
    // Predicated region
    $region82: #{clip_embeddings.1} parent=1 // pred_check
      _
    $region83: #{clip_embeddings.1} parent=1 // pred_check_branch
      %325 = sbr.rel target = $region85
    $region84: #{clip_embeddings.1} parent=1 // pred_region
      %326 = sst [smem:[#allocation10]] [#allocation49]
      %327 = sst [smem:[#allocation11]] [#allocation48]
    $region85: #{clip_embeddings.1} parent=1 // pred_fallthru
      _
    %329 = shalt.err (0)
    %s331 = sshll.u32 %s322, 4
    %s332 = int_to_ptr.vmem [resolvable:$true] %s331
    %334 = dma.hbm_to_vmem [thread:$0]  %s321, 16, %s332, %s323
    %s335 = sld [smem:[#allocation5 + $0x14]]
    %s336 = smul.addr %s335, 16
    %s337 = scalar_lea.hbm %s2, %s336
    %s338 = scalar_lea.vmem [#allocation2], 20
    %s339 = scalar_lea.sflag [#allocation3], 20
    // Predicated region
    $region86: #{clip_embeddings.1} parent=1 // pred_check
      _
    $region87: #{clip_embeddings.1} parent=1 // pred_check_branch
      %341 = sbr.rel target = $region89
    $region88: #{clip_embeddings.1} parent=1 // pred_region
      %342 = sst [smem:[#allocation10]] [#allocation51]
      %343 = sst [smem:[#allocation11]] [#allocation50]
    $region89: #{clip_embeddings.1} parent=1 // pred_fallthru
      _
    %345 = shalt.err (0)
    %s347 = sshll.u32 %s338, 4
    %s348 = int_to_ptr.vmem [resolvable:$true] %s347
    %350 = dma.hbm_to_vmem [thread:$0]  %s337, 16, %s348, %s339
    %s351 = sld [smem:[#allocation5 + $0x15]]
    %s352 = smul.addr %s351, 16
    %s353 = scalar_lea.hbm %s2, %s352
    %s354 = scalar_lea.vmem [#allocation2], 21
    %s355 = scalar_lea.sflag [#allocation3], 21
    // Predicated region
    $region90: #{clip_embeddings.1} parent=1 // pred_check
      _
    $region91: #{clip_embeddings.1} parent=1 // pred_check_branch
      %357 = sbr.rel target = $region93
    $region92: #{clip_embeddings.1} parent=1 // pred_region
      %358 = sst [smem:[#allocation10]] [#allocation53]
      %359 = sst [smem:[#allocation11]] [#allocation52]
    $region93: #{clip_embeddings.1} parent=1 // pred_fallthru
      _
    %361 = shalt.err (0)
    %s363 = sshll.u32 %s354, 4
    %s364 = int_to_ptr.vmem [resolvable:$true] %s363
    %366 = dma.hbm_to_vmem [thread:$0]  %s353, 16, %s364, %s355
    %s367 = sld [smem:[#allocation5 + $0x16]]
    %s368 = smul.addr %s367, 16
    %s369 = scalar_lea.hbm %s2, %s368
    %s370 = scalar_lea.vmem [#allocation2], 22
    %s371 = scalar_lea.sflag [#allocation3], 22
    // Predicated region
    $region94: #{clip_embeddings.1} parent=1 // pred_check
      _
    $region95: #{clip_embeddings.1} parent=1 // pred_check_branch
      %373 = sbr.rel target = $region97
    $region96: #{clip_embeddings.1} parent=1 // pred_region
      %374 = sst [smem:[#allocation10]] [#allocation55]
      %375 = sst [smem:[#allocation11]] [#allocation54]
    $region97: #{clip_embeddings.1} parent=1 // pred_fallthru
      _
    %377 = shalt.err (0)
    %s379 = sshll.u32 %s370, 4
    %s380 = int_to_ptr.vmem [resolvable:$true] %s379
    %382 = dma.hbm_to_vmem [thread:$0]  %s369, 16, %s380, %s371
    %s383 = sld [smem:[#allocation5 + $0x17]]
    %s384 = smul.addr %s383, 16
    %s385 = scalar_lea.hbm %s2, %s384
    %s386 = scalar_lea.vmem [#allocation2], 23
    %s387 = scalar_lea.sflag [#allocation3], 23
    // Predicated region
    $region98: #{clip_embeddings.1} parent=1 // pred_check
      _
    $region99: #{clip_embeddings.1} parent=1 // pred_check_branch
      %389 = sbr.rel target = $region101
    $region100: #{clip_embeddings.1} parent=1 // pred_region
      %390 = sst [smem:[#allocation10]] [#allocation57]
      %391 = sst [smem:[#allocation11]] [#allocation56]
    $region101: #{clip_embeddings.1} parent=1 // pred_fallthru
      _
    %393 = shalt.err (0)
    %s395 = sshll.u32 %s386, 4
    %s396 = int_to_ptr.vmem [resolvable:$true] %s395
    %398 = dma.hbm_to_vmem [thread:$0]  %s385, 16, %s396, %s387
    %s399 = sld [smem:[#allocation5 + $0x18]]
    %s400 = smul.addr %s399, 16
    %s401 = scalar_lea.hbm %s2, %s400
    %s402 = scalar_lea.vmem [#allocation2], 24
    %s403 = scalar_lea.sflag [#allocation3], 24
    // Predicated region
    $region102: #{clip_embeddings.1} parent=1 // pred_check
      _
    $region103: #{clip_embeddings.1} parent=1 // pred_check_branch
      %405 = sbr.rel target = $region105
    $region104: #{clip_embeddings.1} parent=1 // pred_region
      %406 = sst [smem:[#allocation10]] [#allocation59]
      %407 = sst [smem:[#allocation11]] [#allocation58]
    $region105: #{clip_embeddings.1} parent=1 // pred_fallthru
      _
    %409 = shalt.err (0)
    %s411 = sshll.u32 %s402, 4
    %s412 = int_to_ptr.vmem [resolvable:$true] %s411
    %414 = dma.hbm_to_vmem [thread:$0]  %s401, 16, %s412, %s403
    %s415 = sld [smem:[#allocation5 + $0x19]]
    %s416 = smul.addr %s415, 16
    %s417 = scalar_lea.hbm %s2, %s416
    %s418 = scalar_lea.vmem [#allocation2], 25
    %s419 = scalar_lea.sflag [#allocation3], 25
    // Predicated region
    $region106: #{clip_embeddings.1} parent=1 // pred_check
      _
    $region107: #{clip_embeddings.1} parent=1 // pred_check_branch
      %421 = sbr.rel target = $region109
    $region108: #{clip_embeddings.1} parent=1 // pred_region
      %422 = sst [smem:[#allocation10]] [#allocation61]
      %423 = sst [smem:[#allocation11]] [#allocation60]
    $region109: #{clip_embeddings.1} parent=1 // pred_fallthru
      _
    %425 = shalt.err (0)
    %s427 = sshll.u32 %s418, 4
    %s428 = int_to_ptr.vmem [resolvable:$true] %s427
    %430 = dma.hbm_to_vmem [thread:$0]  %s417, 16, %s428, %s419
    %s431 = sld [smem:[#allocation5 + $0x1a]]
    %s432 = smul.addr %s431, 16
    %s433 = scalar_lea.hbm %s2, %s432
    %s434 = scalar_lea.vmem [#allocation2], 26
    %s435 = scalar_lea.sflag [#allocation3], 26
    // Predicated region
    $region110: #{clip_embeddings.1} parent=1 // pred_check
      _
    $region111: #{clip_embeddings.1} parent=1 // pred_check_branch
      %437 = sbr.rel target = $region113
    $region112: #{clip_embeddings.1} parent=1 // pred_region
      %438 = sst [smem:[#allocation10]] [#allocation63]
      %439 = sst [smem:[#allocation11]] [#allocation62]
    $region113: #{clip_embeddings.1} parent=1 // pred_fallthru
      _
    %441 = shalt.err (0)
    %s443 = sshll.u32 %s434, 4
    %s444 = int_to_ptr.vmem [resolvable:$true] %s443
    %446 = dma.hbm_to_vmem [thread:$0]  %s433, 16, %s444, %s435
    %s447 = sld [smem:[#allocation5 + $0x1b]]
    %s448 = smul.addr %s447, 16
    %s449 = scalar_lea.hbm %s2, %s448
    %s450 = scalar_lea.vmem [#allocation2], 27
    %s451 = scalar_lea.sflag [#allocation3], 27
    // Predicated region
    $region114: #{clip_embeddings.1} parent=1 // pred_check
      _
    $region115: #{clip_embeddings.1} parent=1 // pred_check_branch
      %453 = sbr.rel target = $region117
    $region116: #{clip_embeddings.1} parent=1 // pred_region
      %454 = sst [smem:[#allocation10]] [#allocation65]
      %455 = sst [smem:[#allocation11]] [#allocation64]
    $region117: #{clip_embeddings.1} parent=1 // pred_fallthru
      _
    %457 = shalt.err (0)
    %s459 = sshll.u32 %s450, 4
    %s460 = int_to_ptr.vmem [resolvable:$true] %s459
    %462 = dma.hbm_to_vmem [thread:$0]  %s449, 16, %s460, %s451
    %s463 = sld [smem:[#allocation5 + $0x1c]]
    %s464 = smul.addr %s463, 16
    %s465 = scalar_lea.hbm %s2, %s464
    %s466 = scalar_lea.vmem [#allocation2], 28
    %s467 = scalar_lea.sflag [#allocation3], 28
    // Predicated region
    $region118: #{clip_embeddings.1} parent=1 // pred_check
      _
    $region119: #{clip_embeddings.1} parent=1 // pred_check_branch
      %469 = sbr.rel target = $region121
    $region120: #{clip_embeddings.1} parent=1 // pred_region
      %470 = sst [smem:[#allocation10]] [#allocation67]
      %471 = sst [smem:[#allocation11]] [#allocation66]
    $region121: #{clip_embeddings.1} parent=1 // pred_fallthru
      _
    %473 = shalt.err (0)
    %s475 = sshll.u32 %s466, 4
    %s476 = int_to_ptr.vmem [resolvable:$true] %s475
    %478 = dma.hbm_to_vmem [thread:$0]  %s465, 16, %s476, %s467
    %s479 = sld [smem:[#allocation5 + $0x1d]]
    %s480 = smul.addr %s479, 16
    %s481 = scalar_lea.hbm %s2, %s480
    %s482 = scalar_lea.vmem [#allocation2], 29
    %s483 = scalar_lea.sflag [#allocation3], 29
    // Predicated region
    $region122: #{clip_embeddings.1} parent=1 // pred_check
      _
    $region123: #{clip_embeddings.1} parent=1 // pred_check_branch
      %485 = sbr.rel target = $region125
    $region124: #{clip_embeddings.1} parent=1 // pred_region
      %486 = sst [smem:[#allocation10]] [#allocation69]
      %487 = sst [smem:[#allocation11]] [#allocation68]
    $region125: #{clip_embeddings.1} parent=1 // pred_fallthru
      _
    %489 = shalt.err (0)
    %s491 = sshll.u32 %s482, 4
    %s492 = int_to_ptr.vmem [resolvable:$true] %s491
    %494 = dma.hbm_to_vmem [thread:$0]  %s481, 16, %s492, %s483
    %s495 = sld [smem:[#allocation5 + $0x1e]]
    %s496 = smul.addr %s495, 16
    %s497 = scalar_lea.hbm %s2, %s496
    %s498 = scalar_lea.vmem [#allocation2], 30
    %s499 = scalar_lea.sflag [#allocation3], 30
    // Predicated region
    $region126: #{clip_embeddings.1} parent=1 // pred_check
      _
    $region127: #{clip_embeddings.1} parent=1 // pred_check_branch
      %501 = sbr.rel target = $region129
    $region128: #{clip_embeddings.1} parent=1 // pred_region
      %502 = sst [smem:[#allocation10]] [#allocation71]
      %503 = sst [smem:[#allocation11]] [#allocation70]
    $region129: #{clip_embeddings.1} parent=1 // pred_fallthru
      _
    %505 = shalt.err (0)
    %s507 = sshll.u32 %s498, 4
    %s508 = int_to_ptr.vmem [resolvable:$true] %s507
    %510 = dma.hbm_to_vmem [thread:$0]  %s497, 16, %s508, %s499
    %s511 = sld [smem:[#allocation5 + $0x1f]]
    %s512 = smul.addr %s511, 16
    %s513 = scalar_lea.hbm %s2, %s512
    %s514 = scalar_lea.vmem [#allocation2], 31
    %s515 = scalar_lea.sflag [#allocation3], 31
    // Predicated region
    $region130: #{clip_embeddings.1} parent=1 // pred_check
      _
    $region131: #{clip_embeddings.1} parent=1 // pred_check_branch
      %517 = sbr.rel target = $region133
    $region132: #{clip_embeddings.1} parent=1 // pred_region
      %518 = sst [smem:[#allocation10]] [#allocation73]
      %519 = sst [smem:[#allocation11]] [#allocation72]
    $region133: #{clip_embeddings.1} parent=1 // pred_fallthru
      _
    %521 = shalt.err (0)
    %s523 = sshll.u32 %s514, 4
    %s524 = int_to_ptr.vmem [resolvable:$true] %s523
    %526 = dma.hbm_to_vmem [thread:$0]  %s513, 16, %s524, %s515
    %s527 = smul.u32 1, 1
    %s528 = sshll.u32 %s527, 4
    %529 = dma.done [#allocation3], %s528
    %s530 = sshll.u32 %s527, 4
    %531 = dma.done %s35, %s530
    %s532 = sshll.u32 %s527, 4
    %533 = dma.done %s51, %s532
    %s534 = sshll.u32 %s527, 4
    %535 = dma.done %s67, %s534
    %s536 = sshll.u32 %s527, 4
    %537 = dma.done %s83, %s536
    %s538 = sshll.u32 %s527, 4
    %539 = dma.done %s99, %s538
    %s540 = sshll.u32 %s527, 4
    %541 = dma.done %s115, %s540
    %s542 = sshll.u32 %s527, 4
    %543 = dma.done %s131, %s542
    %s544 = sshll.u32 %s527, 4
    %545 = dma.done %s147, %s544
    %s546 = sshll.u32 %s527, 4
    %547 = dma.done %s163, %s546
    %s548 = sshll.u32 %s527, 4
    %549 = dma.done %s179, %s548
    %s550 = sshll.u32 %s527, 4
    %551 = dma.done %s195, %s550
    %s552 = sshll.u32 %s527, 4
    %553 = dma.done %s211, %s552
    %s554 = sshll.u32 %s527, 4
    %555 = dma.done %s227, %s554
    %s556 = sshll.u32 %s527, 4
    %557 = dma.done %s243, %s556
    %s558 = sshll.u32 %s527, 4
    %559 = dma.done %s259, %s558
    %s560 = sshll.u32 %s527, 4
    %561 = dma.done %s275, %s560
    %s562 = sshll.u32 %s527, 4
    %563 = dma.done %s291, %s562
    %s564 = sshll.u32 %s527, 4
    %565 = dma.done %s307, %s564
    %s566 = sshll.u32 %s527, 4
    %567 = dma.done %s323, %s566
    %s568 = sshll.u32 %s527, 4
    %569 = dma.done %s339, %s568
    %s570 = sshll.u32 %s527, 4
    %571 = dma.done %s355, %s570
    %s572 = sshll.u32 %s527, 4
    %573 = dma.done %s371, %s572
    %s574 = sshll.u32 %s527, 4
    %575 = dma.done %s387, %s574
    %s576 = sshll.u32 %s527, 4
    %577 = dma.done %s403, %s576
    %s578 = sshll.u32 %s527, 4
    %579 = dma.done %s419, %s578
    %s580 = sshll.u32 %s527, 4
    %581 = dma.done %s435, %s580
    %s582 = sshll.u32 %s527, 4
    %583 = dma.done %s451, %s582
    %s584 = sshll.u32 %s527, 4
    %585 = dma.done %s467, %s584
    %s586 = sshll.u32 %s527, 4
    %587 = dma.done %s483, %s586
    %s588 = sshll.u32 %s527, 4
    %589 = dma.done %s499, %s588
    %s590 = sshll.u32 %s527, 4
    %591 = dma.done %s515, %s590
    %v592 = vld [vmem:[%s1] sm:$0xff]
    %v593 = vld [vmem:[%s1 + $0x8] sm:$0xff]
    %v594 = vld [vmem:[#allocation2] sm:$0xff]
    %v595 = vld [vmem:[#allocation2 + $0x8] sm:$0xff]
    %v596 = vld [vmem:[#allocation2 + $0x10] sm:$0xff]
    %v597 = vld [vmem:[#allocation2 + $0x18] sm:$0xff]
    %v598 = vadd.f32 %v594, %v592
    %v599 = vadd.f32 %v595, %v593
    %v600 = vadd.f32 %v596, %v592
    %v601 = vadd.f32 %v597, %v593
    %602 = vst [vmem:[#allocation6] sm:$0xff] %v598
    %603 = vst [vmem:[#allocation6 + $0x8] sm:$0xff] %v599
    %604 = vst [vmem:[#allocation6 + $0x10] sm:$0xff] %v600
    %605 = vst [vmem:[#allocation6 + $0x18] sm:$0xff] %v601
    // Predicated region
    $region134: #{clip_embeddings.1} parent=1 // pred_check
      _
    $region135: #{clip_embeddings.1} parent=1 // pred_check_branch
      %607 = sbr.rel (0) target = $region137
    $region136: #{clip_embeddings.1} parent=1 // pred_region
      %s609 = ssub.s32 512, 512
      %610 = vsyncadd [#allocation7], %s609
      %s611 = sshll.u32 [#allocation6], 4
      %s612 = int_to_ptr.vmem [resolvable:$true] %s611
      %617 = dma.vmem_to_hbm [thread:$0]  %s612, 512, %s3, [#allocation7], 128, 128, 8
    $region137: #{clip_embeddings.1} parent=1 // pred_fallthru
      _
    // Predicated region
    $region138: #{clip_embeddings.1} parent=1 // pred_check
      _
    $region139: #{clip_embeddings.1} parent=1 // pred_check_branch
      %619 = sbr.rel (0) target = $region141
    $region140: #{clip_embeddings.1} parent=1 // pred_region
      %620 = dma.done [#allocation7], 512
    $region141: #{clip_embeddings.1} parent=1 // pred_fallthru
      _
    %621 = vsyncpa [#allocation7], 1
  %622 = vsyncmov [#allocation3]
  %s623 = vpop.sfrf %622
  %p624 = scmp.eq.s32.totalorder %s623, 0
  %p625 = pneg %p624
  %627 = shalt.err (%p625)
  %s628 = scalar_lea.sflag [#allocation3], 1
  %629 = vsyncmov %s628
  %s630 = vpop.sfrf %629
  %p631 = scmp.eq.s32.totalorder %s630, 0
  %p632 = pneg %p631
  %634 = shalt.err (%p632)
  %s635 = scalar_lea.sflag [#allocation3], 2
  %636 = vsyncmov %s635
  %s637 = vpop.sfrf %636
  %p638 = scmp.eq.s32.totalorder %s637, 0
  %p639 = pneg %p638
  %641 = shalt.err (%p639)
  %s642 = scalar_lea.sflag [#allocation3], 3
  %643 = vsyncmov %s642
  %s644 = vpop.sfrf %643
  %p645 = scmp.eq.s32.totalorder %s644, 0
  %p646 = pneg %p645
  %648 = shalt.err (%p646)
  %s649 = scalar_lea.sflag [#allocation3], 4
  %650 = vsyncmov %s649
  %s651 = vpop.sfrf %650
  %p652 = scmp.eq.s32.totalorder %s651, 0
  %p653 = pneg %p652
  %655 = shalt.err (%p653)
  %s656 = scalar_lea.sflag [#allocation3], 5
  %657 = vsyncmov %s656
  %s658 = vpop.sfrf %657
  %p659 = scmp.eq.s32.totalorder %s658, 0
  %p660 = pneg %p659
  %662 = shalt.err (%p660)
  %s663 = scalar_lea.sflag [#allocation3], 6
  %664 = vsyncmov %s663
  %s665 = vpop.sfrf %664
  %p666 = scmp.eq.s32.totalorder %s665, 0
  %p667 = pneg %p666
  %669 = shalt.err (%p667)
  %s670 = scalar_lea.sflag [#allocation3], 7
  %671 = vsyncmov %s670
  %s672 = vpop.sfrf %671
  %p673 = scmp.eq.s32.totalorder %s672, 0
  %p674 = pneg %p673
  %676 = shalt.err (%p674)
  %s677 = scalar_lea.sflag [#allocation3], 8
  %678 = vsyncmov %s677
  %s679 = vpop.sfrf %678
  %p680 = scmp.eq.s32.totalorder %s679, 0
  %p681 = pneg %p680
  %683 = shalt.err (%p681)
  %s684 = scalar_lea.sflag [#allocation3], 9
  %685 = vsyncmov %s684
  %s686 = vpop.sfrf %685
  %p687 = scmp.eq.s32.totalorder %s686, 0
  %p688 = pneg %p687
  %690 = shalt.err (%p688)
  %s691 = scalar_lea.sflag [#allocation3], 10
  %692 = vsyncmov %s691
  %s693 = vpop.sfrf %692
  %p694 = scmp.eq.s32.totalorder %s693, 0
  %p695 = pneg %p694
  %697 = shalt.err (%p695)
  %s698 = scalar_lea.sflag [#allocation3], 11
  %699 = vsyncmov %s698
  %s700 = vpop.sfrf %699
  %p701 = scmp.eq.s32.totalorder %s700, 0
  %p702 = pneg %p701
  %704 = shalt.err (%p702)
  %s705 = scalar_lea.sflag [#allocation3], 12
  %706 = vsyncmov %s705
  %s707 = vpop.sfrf %706
  %p708 = scmp.eq.s32.totalorder %s707, 0
  %p709 = pneg %p708
  %711 = shalt.err (%p709)
  %s712 = scalar_lea.sflag [#allocation3], 13
  %713 = vsyncmov %s712
  %s714 = vpop.sfrf %713
  %p715 = scmp.eq.s32.totalorder %s714, 0
  %p716 = pneg %p715
  %718 = shalt.err (%p716)
  %s719 = scalar_lea.sflag [#allocation3], 14
  %720 = vsyncmov %s719
  %s721 = vpop.sfrf %720
  %p722 = scmp.eq.s32.totalorder %s721, 0
  %p723 = pneg %p722
  %725 = shalt.err (%p723)
  %s726 = scalar_lea.sflag [#allocation3], 15
  %727 = vsyncmov %s726
  %s728 = vpop.sfrf %727
  %p729 = scmp.eq.s32.totalorder %s728, 0
  %p730 = pneg %p729
  %732 = shalt.err (%p730)
  %s733 = scalar_lea.sflag [#allocation3], 16
  %734 = vsyncmov %s733
  %s735 = vpop.sfrf %734
  %p736 = scmp.eq.s32.totalorder %s735, 0
  %p737 = pneg %p736
  %739 = shalt.err (%p737)
  %s740 = scalar_lea.sflag [#allocation3], 17
  %741 = vsyncmov %s740
  %s742 = vpop.sfrf %741
  %p743 = scmp.eq.s32.totalorder %s742, 0
  %p744 = pneg %p743
  %746 = shalt.err (%p744)
  %s747 = scalar_lea.sflag [#allocation3], 18
  %748 = vsyncmov %s747
  %s749 = vpop.sfrf %748
  %p750 = scmp.eq.s32.totalorder %s749, 0
  %p751 = pneg %p750
  %753 = shalt.err (%p751)
  %s754 = scalar_lea.sflag [#allocation3], 19
  %755 = vsyncmov %s754
  %s756 = vpop.sfrf %755
  %p757 = scmp.eq.s32.totalorder %s756, 0
  %p758 = pneg %p757
  %760 = shalt.err (%p758)
  %s761 = scalar_lea.sflag [#allocation3], 20
  %762 = vsyncmov %s761
  %s763 = vpop.sfrf %762
  %p764 = scmp.eq.s32.totalorder %s763, 0
  %p765 = pneg %p764
  %767 = shalt.err (%p765)
  %s768 = scalar_lea.sflag [#allocation3], 21
  %769 = vsyncmov %s768
  %s770 = vpop.sfrf %769
  %p771 = scmp.eq.s32.totalorder %s770, 0
  %p772 = pneg %p771
  %774 = shalt.err (%p772)
  %s775 = scalar_lea.sflag [#allocation3], 22
  %776 = vsyncmov %s775
  %s777 = vpop.sfrf %776
  %p778 = scmp.eq.s32.totalorder %s777, 0
  %p779 = pneg %p778
  %781 = shalt.err (%p779)
  %s782 = scalar_lea.sflag [#allocation3], 23
  %783 = vsyncmov %s782
  %s784 = vpop.sfrf %783
  %p785 = scmp.eq.s32.totalorder %s784, 0
  %p786 = pneg %p785
  %788 = shalt.err (%p786)
  %s789 = scalar_lea.sflag [#allocation3], 24
  %790 = vsyncmov %s789
  %s791 = vpop.sfrf %790
  %p792 = scmp.eq.s32.totalorder %s791, 0
  %p793 = pneg %p792
  %795 = shalt.err (%p793)
  %s796 = scalar_lea.sflag [#allocation3], 25
  %797 = vsyncmov %s796
  %s798 = vpop.sfrf %797
  %p799 = scmp.eq.s32.totalorder %s798, 0
  %p800 = pneg %p799
  %802 = shalt.err (%p800)
  %s803 = scalar_lea.sflag [#allocation3], 26
  %804 = vsyncmov %s803
  %s805 = vpop.sfrf %804
  %p806 = scmp.eq.s32.totalorder %s805, 0
  %p807 = pneg %p806
  %809 = shalt.err (%p807)
  %s810 = scalar_lea.sflag [#allocation3], 27
  %811 = vsyncmov %s810
  %s812 = vpop.sfrf %811
  %p813 = scmp.eq.s32.totalorder %s812, 0
  %p814 = pneg %p813
  %816 = shalt.err (%p814)
  %s817 = scalar_lea.sflag [#allocation3], 28
  %818 = vsyncmov %s817
  %s819 = vpop.sfrf %818
  %p820 = scmp.eq.s32.totalorder %s819, 0
  %p821 = pneg %p820
  %823 = shalt.err (%p821)
  %s824 = scalar_lea.sflag [#allocation3], 29
  %825 = vsyncmov %s824
  %s826 = vpop.sfrf %825
  %p827 = scmp.eq.s32.totalorder %s826, 0
  %p828 = pneg %p827
  %830 = shalt.err (%p828)
  %s831 = scalar_lea.sflag [#allocation3], 30
  %832 = vsyncmov %s831
  %s833 = vpop.sfrf %832
  %p834 = scmp.eq.s32.totalorder %s833, 0
  %p835 = pneg %p834
  %837 = shalt.err (%p835)
  %s838 = scalar_lea.sflag [#allocation3], 31
  %839 = vsyncmov %s838
  %s840 = vpop.sfrf %839
  %p841 = scmp.eq.s32.totalorder %s840, 0
  %p842 = pneg %p841
  %844 = shalt.err (%p842)

</llo_original>
